<compile_context>
chip_gen: v6e
topology: v6e:2x2x1
jax: 0.10.0
libtpu: 0.0.40
codegen_flags: <defaults>
</compile_context>

<pallas_src>
import jax
import jax.numpy as jnp
from jax.experimental import pallas as pl
from jax.experimental.pallas import tpu as pltpu


def _round_up(v, m):
    return (v + m - 1) // m * m


def _pad_to(a, shape):
    return jnp.pad(a, [(0, s - d) for d, s in zip(a.shape, shape)])


# ------------------------------ fused kernel --------------------------------

def _make_fused_kernel(nL, Hp, Np, TE, ones_col):
    """Edge-MLP + scatter-mean + node-MLP, fused. Grid: (num_edge_tiles,)."""
    bf16 = jnp.bfloat16
    f32 = jnp.float32

    def kernel(x_ref, ea_ref, row_ref, col_ref, wfirst_ref, wrest_ref, b_ref,
               out_ref):
        e = pl.program_id(0)

        @pl.when(e == 0)
        def _init():
            out_ref[...] = jnp.zeros_like(out_ref)

        x_bf = x_ref[...]                     # [Np, Hp] bf16 (resident)
        ea = ea_ref[...]                      # [TE, Hp] bf16
        row_t = row_ref[...]                  # [TE, 1]  int32
        col_t = col_ref[...]                  # [1, TE]  int32

        # ---- gather x[row] via exact one-hot matmul on the MXU -------------
        gth = jnp.where(
            jax.lax.broadcasted_iota(jnp.int32, (TE, Np), 1) == row_t,
            1.0, 0.0).astype(bf16)            # [TE, Np]
        xg = jnp.dot(gth, x_bf, preferred_element_type=f32)   # [TE, Hp] f32

        # ---- edge MLP: first layer as ONE K=2*Hp matmul ---------------------
        h_in = jnp.concatenate([xg.astype(bf16), ea], axis=1)  # [TE, 2*Hp]
        h = jnp.dot(h_in, wfirst_ref[0], preferred_element_type=f32) + b_ref[0]
        h = jnp.maximum(h, 0.0)
        for l in range(1, nL):
            h = jnp.dot(h.astype(bf16), wrest_ref[l - 1],
                        preferred_element_type=f32) + b_ref[l]
            if l < nL - 1:
                h = jnp.maximum(h, 0.0)
        # b_ref[nL-1][0, ones_col] == 1.0 (set host-side); its weight column is
        # zero-padded and there is no trailing ReLU, so h[:, ones_col] == 1.0
        # -> segment counts are folded into the scatter matmul for free.

        # ---- scatter-add via one-hot segment matmul -------------------------
        # Padded edges carry col == Np (sentinel) and match no node row.
        seg = jnp.where(
            jax.lax.broadcasted_iota(jnp.int32, (Np, TE), 0) == col_t,
            1.0, 0.0).astype(bf16)            # [Np, TE]
        out_ref[...] += jnp.dot(seg, h.astype(bf16),
                                preferred_element_type=f32)

        # ---- epilogue: normalize to mean, run node MLP ----------------------
        @pl.when(e == pl.num_programs(0) - 1)
        def _finalize():
            acc = out_ref[...]                                    # [Np, Hp] f32
            cnt = out_ref[:, ones_col:ones_col + 1]               # [Np, 1]
            inv = pl.reciprocal(jnp.maximum(cnt, 1.0), approx=True)
            mean_bf = (acc * inv).astype(bf16)                    # empty seg -> 0

            g_in = jnp.concatenate([x_bf, mean_bf], axis=1)       # [Np, 2*Hp]
            g = (jnp.dot(g_in, wfirst_ref[1], preferred_element_type=f32)
                 + b_ref[nL])
            g = jnp.maximum(g, 0.0)
            for l in range(1, nL):
                g = jnp.dot(g.astype(bf16), wrest_ref[(nL - 1) + (l - 1)],
                            preferred_element_type=f32) + b_ref[nL + l]
                if l < nL - 1:
                    g = jnp.maximum(g, 0.0)
            out_ref[...] = g.astype(out_ref.dtype)

    return kernel


# --------------------------- parameter setup --------------------------------

def init_mlp_params(key, num_layers, in_c, hid_c, out_c):
    """torch.nn.Linear-style uniform(+-1/sqrt(fan_in)) init."""
    assert num_layers >= 2
    dims = [in_c] + [hid_c] * (num_layers - 1) + [out_c]
    weights, biases = [], []
    for i in range(num_layers):
        fan_in = dims[i]
        key, kw, kb = jax.random.split(key, 3)
        bound = 1.0 / jnp.sqrt(jnp.float32(fan_in))
        weights.append(jax.random.uniform(kw, (fan_in, dims[i + 1]),
                                          jnp.float32, -bound, bound))
        biases.append(jax.random.uniform(kb, (1, dims[i + 1]),
                                         jnp.float32, -bound, bound))
    return key, weights, biases


def init_node_model_params(key, hidden_channels, mlp_layers):
    key, w1, b1 = init_mlp_params(key, mlp_layers, 2 * hidden_channels,
                                  hidden_channels, hidden_channels)
    key, w2, b2 = init_mlp_params(key, mlp_layers, 2 * hidden_channels,
                                  hidden_channels, hidden_channels)
    return {"mlp1_w": w1, "mlp1_b": b1, "mlp2_w": w2, "mlp2_b": b2}


def _prep_params(params, H, Hp, ones_col):
    """Pad, split/stack first-layer weights, stack the rest, set count bias."""
    bf16, f32 = jnp.bfloat16, jnp.float32

    def first_stacked(w0):
        # cat([a, b]) @ W == [a || b] @ [Wa; Wb]; zero-pad each half to (Hp, Hp)
        wa = _pad_to(w0[:H, :], (Hp, Hp))
        wb = _pad_to(w0[H:, :], (Hp, Hp))
        return jnp.concatenate([wa, wb], axis=0)          # (2*Hp, Hp)

    wfirst = jnp.stack([first_stacked(params["mlp1_w"][0]),
                        first_stacked(params["mlp2_w"][0])]).astype(bf16)
    wrest = jnp.stack(
        [_pad_to(w, (Hp, Hp))
         for w in list(params["mlp1_w"][1:]) + list(params["mlp2_w"][1:])]
    ).astype(bf16)                                         # (2*(nL-1), Hp, Hp)

    b1 = [_pad_to(b, (1, Hp)) for b in params["mlp1_b"]]
    # Ones-column trick: last edge-MLP layer has a zero weight column at
    # ones_col and no trailing ReLU, so bias alone produces the 1.0 count lane.
    b1[-1] = b1[-1].at[0, ones_col].set(1.0)
    b2 = [_pad_to(b, (1, Hp)) for b in params["mlp2_b"]]
    bias = jnp.stack(b1 + b2).astype(f32)                  # (2*nL, 1, Hp)
    return wfirst, wrest, bias


# ------------------------------ NodeModel ------------------------------------

def node_model_forward(params, x, edge_index, edge_attr, u=None, batch=None,
                       *, edge_tile=512):
    # u and batch are unused in the reference forward pass.
    N, H = x.shape
    E = edge_attr.shape[0]
    nL = len(params["mlp1_b"])

    Hp = _round_up(H + 1, 128)     # lane-dense features + one spare count lane
    Np = _round_up(N, 128)
    TE = max(128, min(_round_up(edge_tile, 128), _round_up(E, 128)))
    Ep = _round_up(E, TE)
    ones_col = H                   # padding lane used for segment counts

    row = edge_index[0].astype(jnp.int32)
    col = edge_index[1].astype(jnp.int32)

    x_p = _pad_to(x, (Np, Hp)).astype(jnp.bfloat16)
    ea_p = _pad_to(edge_attr, (Ep, Hp)).astype(jnp.bfloat16)
    row_p = _pad_to(row, (Ep,)).reshape(Ep, 1)              # pad -> node 0
    col_p = jnp.full((Ep,), Np, jnp.int32).at[:E].set(col).reshape(1, Ep)

    wfirst, wrest, bias = _prep_params(params, H, Hp, ones_col)

    resident2 = lambda e: (0, 0)
    resident3 = lambda e: (0, 0, 0)

    out = pl.pallas_call(
        _make_fused_kernel(nL, Hp, Np, TE, ones_col),
        grid=(Ep // TE,),
        in_specs=[
            pl.BlockSpec((Np, Hp), resident2),              # x (resident)
            pl.BlockSpec((TE, Hp), lambda e: (e, 0)),       # edge_attr tile
            pl.BlockSpec((TE, 1), lambda e: (e, 0)),        # row tile
            pl.BlockSpec((1, TE), lambda e: (0, e)),        # col tile
            pl.BlockSpec(wfirst.shape, resident3),          # stacked 1st-layer W
            pl.BlockSpec(wrest.shape, resident3),           # stacked other W
            pl.BlockSpec(bias.shape, resident3),            # stacked biases
        ],
        out_specs=pl.BlockSpec((Np, Hp), resident2),        # also the accumulator
        out_shape=jax.ShapeDtypeStruct((Np, Hp), jnp.float32),
        compiler_params=pltpu.CompilerParams(
            dimension_semantics=("arbitrary",),             # edge axis = reduction
            vmem_limit_bytes=64 * 1024 * 1024,
        ),
    )(x_p, ea_p, row_p, col_p, wfirst, wrest, bias)
    return out[:N, :H]


# ---------------------- pure-JAX reference (mirrors bf16) ---------------------

def _node_model_ref(params, x, edge_index, edge_attr):
    bf, f32 = jnp.bfloat16, jnp.float32
    row, col = edge_index[0], edge_index[1]
    N = x.shape[0]

    def dot_bf(a, w):
        return jnp.dot(a.astype(bf), w.astype(bf), preferred_element_type=f32)

    def mlp(first_parts, ws, bs):
        w0 = ws[0]
        h = bs[0].astype(f32)
        off = 0
        for part in first_parts:
            h = h + dot_bf(part, w0[off:off + part.shape[1], :])
            off += part.shape[1]
        h = jnp.maximum(h, 0.0)
        for l in range(1, len(ws)):
            h = dot_bf(h, ws[l]) + bs[l].astype(f32)
            if l < len(ws) - 1:
                h = jnp.maximum(h, 0.0)
        return h

    h_e = mlp([x[row], edge_attr], params["mlp1_w"], params["mlp1_b"])
    h_e = h_e.astype(bf).astype(f32)
    summed = jax.ops.segment_sum(h_e, col, num_segments=N)
    counts = jax.ops.segment_sum(jnp.ones((edge_attr.shape[0],), f32), col,
                                 num_segments=N)
    mean = summed / jnp.maximum(counts, 1.0)[:, None]
    return mlp([x, mean.astype(bf).astype(f32)],
               params["mlp2_w"], params["mlp2_b"])


# ---------------------------------- main --------------------------------------

if __name__ == "__main__":
    hidden_channels = 32
    mlp_layers = 3
    N = 8     # nodes
    E = 16    # edges

    key = jax.random.PRNGKey(0)
    key, kx, ke, kr, kc = jax.random.split(key, 5)

    x = jax.random.normal(kx, (N, hidden_channels), jnp.float32)
    edge_attr = jax.random.normal(ke, (E, hidden_channels), jnp.float32)
    row = jax.random.randint(kr, (E,), 0, N, jnp.int32)
    col = jax.random.randint(kc, (E,), 0, N, jnp.int32)
    edge_index = jnp.stack([row, col], axis=0)           # [2, E]
    u = jnp.zeros((1, hidden_channels), jnp.float32)     # unused
    batch = jnp.zeros((N,), jnp.int32)                   # unused

    params = init_node_model_params(jax.random.PRNGKey(42),
                                    hidden_channels, mlp_layers)

    out = node_model_forward(params, x, edge_index, edge_attr, u, batch)
    out = jax.block_until_ready(out)

    ref = _node_model_ref(params, x, edge_index, edge_attr)
    assert out.shape == (N, hidden_channels)
    # bf16 matmuls + approx EUP reciprocal in the mean normalization.
    assert jnp.allclose(out, ref, atol=3e-3, rtol=3e-3), \
        "mismatch vs pure-JAX reference"

    print("KERNEL_OK")
</pallas_src>

<mosaic_0001>
module attributes {stable_mosaic.version = 11 : i64} {
  func.func @kernel(%arg0: i32, %arg1: memref<128x128xbf16, #tpu.memory_space<vmem>>, %arg2: memref<128x128xbf16, #tpu.memory_space<vmem>>, %arg3: memref<128x1xi32, #tpu.memory_space<vmem>>, %arg4: memref<1x128xi32, #tpu.memory_space<vmem>>, %arg5: memref<2x256x128xbf16, #tpu.memory_space<vmem>>, %arg6: memref<4x128x128xbf16, #tpu.memory_space<vmem>>, %arg7: memref<6x1x128xf32, #tpu.memory_space<vmem>>, %arg8: memref<128x128xf32, #tpu.memory_space<vmem>>) attributes {dimension_semantics = [#tpu.dimension_semantics<arbitrary>], iteration_bounds = array<i64: 1>, scalar_prefetch = 0 : i64, scratch_operands = 0 : i64, tpu.core_type = #tpu.core_type<tc>, window_params = [{pipeline_mode = #tpu.pipeline_mode<synchronous>, transform_indices = @transform_0, window_bounds = array<i64: 128, 128>}, {transform_indices = @transform_1, window_bounds = array<i64: 128, 128>}, {transform_indices = @transform_2, window_bounds = array<i64: 128, 1>}, {transform_indices = @transform_3, window_bounds = array<i64: 1, 128>}, {pipeline_mode = #tpu.pipeline_mode<synchronous>, transform_indices = @transform_4, window_bounds = array<i64: 2, 256, 128>}, {pipeline_mode = #tpu.pipeline_mode<synchronous>, transform_indices = @transform_5, window_bounds = array<i64: 4, 128, 128>}, {pipeline_mode = #tpu.pipeline_mode<synchronous>, transform_indices = @transform_6, window_bounds = array<i64: 6, 1, 128>}, {pipeline_mode = #tpu.pipeline_mode<synchronous>, transform_indices = @transform_7, window_bounds = array<i64: 128, 128>}]} {
    %c0_i32 = arith.constant 0 : i32
    %0 = arith.cmpi eq, %arg0, %c0_i32 : i32
    %1 = arith.extui %0 : i1 to i32
    %c0_i32_0 = arith.constant 0 : i32
    %2 = arith.cmpi ne, %1, %c0_i32_0 : i32
    scf.if %2 {
      %cst_40 = arith.constant 0.000000e+00 : f32
      %59 = vector.broadcast %cst_40 : f32 to vector<128x128xf32>
      %c0_41 = arith.constant 0 : index
      %c0_42 = arith.constant 0 : index
      %60 = vector.load %arg8[%c0_41, %c0_42] : memref<128x128xf32, #tpu.memory_space<vmem>>, vector<128x128xf32>
      tpu.vector_store %arg8[%c0_41, %c0_42], %59 {strides = array<i32>} : memref<128x128xf32, #tpu.memory_space<vmem>>, vector<128x128xf32>,
    } else {
    }
    %c0 = arith.constant 0 : index
    %c0_1 = arith.constant 0 : index
    %3 = vector.load %arg1[%c0, %c0_1] : memref<128x128xbf16, #tpu.memory_space<vmem>>, vector<128x128xbf16>
    %c0_2 = arith.constant 0 : index
    %c0_3 = arith.constant 0 : index
    %4 = vector.load %arg2[%c0_2, %c0_3] : memref<128x128xbf16, #tpu.memory_space<vmem>>, vector<128x128xbf16>
    %c0_4 = arith.constant 0 : index
    %c0_5 = arith.constant 0 : index
    %5 = vector.load %arg3[%c0_4, %c0_5] : memref<128x1xi32, #tpu.memory_space<vmem>>, vector<128x1xi32>
    %c0_6 = arith.constant 0 : index
    %c0_7 = arith.constant 0 : index
    %6 = vector.load %arg4[%c0_6, %c0_7] : memref<1x128xi32, #tpu.memory_space<vmem>>, vector<1x128xi32>
    %7 = tpu.iota {dimensions = array<i32: 1>} : vector<128x128xi32>
    %8 = vector.broadcast %5 : vector<128x1xi32> to vector<128x128xi32>
    %9 = arith.cmpi eq, %7, %8 : vector<128x128xi32>
    %cst = arith.constant 1.000000e+00 : f32
    %cst_8 = arith.constant 0.000000e+00 : f32
    %10 = vector.broadcast %cst : f32 to vector<128x128xf32>
    %11 = vector.broadcast %cst_8 : f32 to vector<128x128xf32>
    %12 = arith.select %9, %10, %11 : vector<128x128xi1>, vector<128x128xf32>
    %13 = arith.truncf %12 : vector<128x128xf32> to vector<128x128xbf16>
    %cst_9 = arith.constant dense<0.000000e+00> : vector<128x128xf32>
    %14 = tpu.matmul %13, %3, %cst_9 {dimension_numbers = #tpu.dot_dimension_numbers<[1], [0], [0], [1], [0, 0, 1, 1], [], []>} : vector<128x128xbf16>, vector<128x128xbf16>, vector<128x128xf32> -> vector<128x128xf32>
    %15 = arith.truncf %14 : vector<128x128xf32> to vector<128x128xbf16>
    %16 = tpu.concatenate %15, %4 in 1 : vector<128x128xbf16>, vector<128x128xbf16> -> vector<128x256xbf16>
    %c0_10 = arith.constant 0 : index
    %c0_11 = arith.constant 0 : index
    %c0_12 = arith.constant 0 : index
    %17 = vector.load %arg5[%c0_10, %c0_11, %c0_12] : memref<2x256x128xbf16, #tpu.memory_space<vmem>>, vector<1x256x128xbf16>
    %18 = vector.shape_cast %17 : vector<1x256x128xbf16> to vector<256x128xbf16>
    %cst_13 = arith.constant dense<0.000000e+00> : vector<128x128xf32>
    %19 = tpu.matmul %16, %18, %cst_13 {dimension_numbers = #tpu.dot_dimension_numbers<[1], [0], [0], [1], [0, 0, 1, 1], [], []>} : vector<128x256xbf16>, vector<256x128xbf16>, vector<128x128xf32> -> vector<128x128xf32>
    %c0_14 = arith.constant 0 : index
    %c0_15 = arith.constant 0 : index
    %c0_16 = arith.constant 0 : index
    %20 = vector.load %arg7[%c0_14, %c0_15, %c0_16] : memref<6x1x128xf32, #tpu.memory_space<vmem>>, vector<1x1x128xf32>
    %21 = vector.shape_cast %20 : vector<1x1x128xf32> to vector<1x128xf32>
    %22 = vector.broadcast %21 : vector<1x128xf32> to vector<128x128xf32>
    %23 = arith.addf %19, %22 : vector<128x128xf32>
    %cst_17 = arith.constant 0.000000e+00 : f32
    %24 = vector.broadcast %cst_17 : f32 to vector<128x128xf32>
    %25 = arith.maximumf %23, %24 : vector<128x128xf32>
    %26 = arith.truncf %25 : vector<128x128xf32> to vector<128x128xbf16>
    %c0_18 = arith.constant 0 : index
    %c0_19 = arith.constant 0 : index
    %c0_20 = arith.constant 0 : index
    %27 = vector.load %arg6[%c0_18, %c0_19, %c0_20] : memref<4x128x128xbf16, #tpu.memory_space<vmem>>, vector<1x128x128xbf16>
    %28 = vector.shape_cast %27 : vector<1x128x128xbf16> to vector<128x128xbf16>
    %cst_21 = arith.constant dense<0.000000e+00> : vector<128x128xf32>
    %29 = tpu.matmul %26, %28, %cst_21 {dimension_numbers = #tpu.dot_dimension_numbers<[1], [0], [0], [1], [0, 0, 1, 1], [], []>} : vector<128x128xbf16>, vector<128x128xbf16>, vector<128x128xf32> -> vector<128x128xf32>
    %c1 = arith.constant 1 : index
    %c0_22 = arith.constant 0 : index
    %c0_23 = arith.constant 0 : index
    %30 = vector.load %arg7[%c1, %c0_22, %c0_23] : memref<6x1x128xf32, #tpu.memory_space<vmem>>, vector<1x1x128xf32>
    %31 = vector.shape_cast %30 : vector<1x1x128xf32> to vector<1x128xf32>
    %32 = vector.broadcast %31 : vector<1x128xf32> to vector<128x128xf32>
    %33 = arith.addf %29, %32 : vector<128x128xf32>
    %cst_24 = arith.constant 0.000000e+00 : f32
    %34 = vector.broadcast %cst_24 : f32 to vector<128x128xf32>
    %35 = arith.maximumf %33, %34 : vector<128x128xf32>
    %36 = arith.truncf %35 : vector<128x128xf32> to vector<128x128xbf16>
    %c1_25 = arith.constant 1 : index
    %c0_26 = arith.constant 0 : index
    %c0_27 = arith.constant 0 : index
    %37 = vector.load %arg6[%c1_25, %c0_26, %c0_27] : memref<4x128x128xbf16, #tpu.memory_space<vmem>>, vector<1x128x128xbf16>
    %38 = vector.shape_cast %37 : vector<1x128x128xbf16> to vector<128x128xbf16>
    %cst_28 = arith.constant dense<0.000000e+00> : vector<128x128xf32>
    %39 = tpu.matmul %36, %38, %cst_28 {dimension_numbers = #tpu.dot_dimension_numbers<[1], [0], [0], [1], [0, 0, 1, 1], [], []>} : vector<128x128xbf16>, vector<128x128xbf16>, vector<128x128xf32> -> vector<128x128xf32>
    %c2 = arith.constant 2 : index
    %c0_29 = arith.constant 0 : index
    %c0_30 = arith.constant 0 : index
    %40 = vector.load %arg7[%c2, %c0_29, %c0_30] : memref<6x1x128xf32, #tpu.memory_space<vmem>>, vector<1x1x128xf32>
    %41 = vector.shape_cast %40 : vector<1x1x128xf32> to vector<1x128xf32>
    %42 = vector.broadcast %41 : vector<1x128xf32> to vector<128x128xf32>
    %43 = arith.addf %39, %42 : vector<128x128xf32>
    %44 = tpu.iota {dimensions = array<i32: 0>} : vector<128x128xi32>
    %45 = vector.broadcast %6 : vector<1x128xi32> to vector<128x128xi32>
    %46 = arith.cmpi eq, %44, %45 : vector<128x128xi32>
    %cst_31 = arith.constant 1.000000e+00 : f32
    %cst_32 = arith.constant 0.000000e+00 : f32
    %47 = vector.broadcast %cst_31 : f32 to vector<128x128xf32>
    %48 = vector.broadcast %cst_32 : f32 to vector<128x128xf32>
    %49 = arith.select %46, %47, %48 : vector<128x128xi1>, vector<128x128xf32>
    %50 = arith.truncf %49 : vector<128x128xf32> to vector<128x128xbf16>
    %c0_33 = arith.constant 0 : index
    %c0_34 = arith.constant 0 : index
    %51 = vector.load %arg8[%c0_33, %c0_34] : memref<128x128xf32, #tpu.memory_space<vmem>>, vector<128x128xf32>
    %52 = arith.truncf %43 : vector<128x128xf32> to vector<128x128xbf16>
    %cst_35 = arith.constant dense<0.000000e+00> : vector<128x128xf32>
    %53 = tpu.matmul %50, %52, %cst_35 {dimension_numbers = #tpu.dot_dimension_numbers<[1], [0], [0], [1], [0, 0, 1, 1], [], []>} : vector<128x128xbf16>, vector<128x128xbf16>, vector<128x128xf32> -> vector<128x128xf32>
    %54 = arith.addf %51, %53 : vector<128x128xf32>
    %c0_36 = arith.constant 0 : index
    %c0_37 = arith.constant 0 : index
    %55 = vector.load %arg8[%c0_36, %c0_37] : memref<128x128xf32, #tpu.memory_space<vmem>>, vector<128x128xf32>
    tpu.vector_store %arg8[%c0_36, %c0_37], %54 {strides = array<i32>} : memref<128x128xf32, #tpu.memory_space<vmem>>, vector<128x128xf32>,
    %c0_i32_38 = arith.constant 0 : i32
    %56 = arith.cmpi eq, %arg0, %c0_i32_38 : i32
    %57 = arith.extui %56 : i1 to i32
    %c0_i32_39 = arith.constant 0 : i32
    %58 = arith.cmpi ne, %57, %c0_i32_39 : i32
    scf.if %58 {
      %c0_40 = arith.constant 0 : index
      %c0_41 = arith.constant 0 : index
      %59 = vector.load %arg8[%c0_40, %c0_41] : memref<128x128xf32, #tpu.memory_space<vmem>>, vector<128x128xf32>
      %c0_42 = arith.constant 0 : index
      %c32 = arith.constant 32 : index
      %60 = vector.load %arg8[%c0_42, %c32] : memref<128x128xf32, #tpu.memory_space<vmem>>, vector<128x1xf32>
      %cst_43 = arith.constant 1.000000e+00 : f32
      %61 = vector.broadcast %cst_43 : f32 to vector<128x1xf32>
      %62 = arith.maximumf %60, %61 : vector<128x1xf32>
      %63 = tpu.reciprocal %62 {approx = true} : vector<128x1xf32> -> vector<128x1xf32>
      %64 = vector.broadcast %63 : vector<128x1xf32> to vector<128x128xf32>
      %65 = arith.mulf %59, %64 : vector<128x128xf32>
      %66 = arith.truncf %65 : vector<128x128xf32> to vector<128x128xbf16>
      %67 = tpu.concatenate %3, %66 in 1 : vector<128x128xbf16>, vector<128x128xbf16> -> vector<128x256xbf16>
      %c1_44 = arith.constant 1 : index
      %c0_45 = arith.constant 0 : index
      %c0_46 = arith.constant 0 : index
      %68 = vector.load %arg5[%c1_44, %c0_45, %c0_46] : memref<2x256x128xbf16, #tpu.memory_space<vmem>>, vector<1x256x128xbf16>
      %69 = vector.shape_cast %68 : vector<1x256x128xbf16> to vector<256x128xbf16>
      %cst_47 = arith.constant dense<0.000000e+00> : vector<128x128xf32>
      %70 = tpu.matmul %67, %69, %cst_47 {dimension_numbers = #tpu.dot_dimension_numbers<[1], [0], [0], [1], [0, 0, 1, 1], [], []>} : vector<128x256xbf16>, vector<256x128xbf16>, vector<128x128xf32> -> vector<128x128xf32>
      %c3 = arith.constant 3 : index
      %c0_48 = arith.constant 0 : index
      %c0_49 = arith.constant 0 : index
      %71 = vector.load %arg7[%c3, %c0_48, %c0_49] : memref<6x1x128xf32, #tpu.memory_space<vmem>>, vector<1x1x128xf32>
      %72 = vector.shape_cast %71 : vector<1x1x128xf32> to vector<1x128xf32>
      %73 = vector.broadcast %72 : vector<1x128xf32> to vector<128x128xf32>
      %74 = arith.addf %70, %73 : vector<128x128xf32>
      %cst_50 = arith.constant 0.000000e+00 : f32
      %75 = vector.broadcast %cst_50 : f32 to vector<128x128xf32>
      %76 = arith.maximumf %74, %75 : vector<128x128xf32>
      %77 = arith.truncf %76 : vector<128x128xf32> to vector<128x128xbf16>
      %c2_51 = arith.constant 2 : index
      %c0_52 = arith.constant 0 : index
      %c0_53 = arith.constant 0 : index
      %78 = vector.load %arg6[%c2_51, %c0_52, %c0_53] : memref<4x128x128xbf16, #tpu.memory_space<vmem>>, vector<1x128x128xbf16>
      %79 = vector.shape_cast %78 : vector<1x128x128xbf16> to vector<128x128xbf16>
      %cst_54 = arith.constant dense<0.000000e+00> : vector<128x128xf32>
      %80 = tpu.matmul %77, %79, %cst_54 {dimension_numbers = #tpu.dot_dimension_numbers<[1], [0], [0], [1], [0, 0, 1, 1], [], []>} : vector<128x128xbf16>, vector<128x128xbf16>, vector<128x128xf32> -> vector<128x128xf32>
      %c4 = arith.constant 4 : index
      %c0_55 = arith.constant 0 : index
      %c0_56 = arith.constant 0 : index
      %81 = vector.load %arg7[%c4, %c0_55, %c0_56] : memref<6x1x128xf32, #tpu.memory_space<vmem>>, vector<1x1x128xf32>
      %82 = vector.shape_cast %81 : vector<1x1x128xf32> to vector<1x128xf32>
      %83 = vector.broadcast %82 : vector<1x128xf32> to vector<128x128xf32>
      %84 = arith.addf %80, %83 : vector<128x128xf32>
      %cst_57 = arith.constant 0.000000e+00 : f32
      %85 = vector.broadcast %cst_57 : f32 to vector<128x128xf32>
      %86 = arith.maximumf %84, %85 : vector<128x128xf32>
      %87 = arith.truncf %86 : vector<128x128xf32> to vector<128x128xbf16>
      %c3_58 = arith.constant 3 : index
      %c0_59 = arith.constant 0 : index
      %c0_60 = arith.constant 0 : index
      %88 = vector.load %arg6[%c3_58, %c0_59, %c0_60] : memref<4x128x128xbf16, #tpu.memory_space<vmem>>, vector<1x128x128xbf16>
      %89 = vector.shape_cast %88 : vector<1x128x128xbf16> to vector<128x128xbf16>
      %cst_61 = arith.constant dense<0.000000e+00> : vector<128x128xf32>
      %90 = tpu.matmul %87, %89, %cst_61 {dimension_numbers = #tpu.dot_dimension_numbers<[1], [0], [0], [1], [0, 0, 1, 1], [], []>} : vector<128x128xbf16>, vector<128x128xbf16>, vector<128x128xf32> -> vector<128x128xf32>
      %c5 = arith.constant 5 : index
      %c0_62 = arith.constant 0 : index
      %c0_63 = arith.constant 0 : index
      %91 = vector.load %arg7[%c5, %c0_62, %c0_63] : memref<6x1x128xf32, #tpu.memory_space<vmem>>, vector<1x1x128xf32>
      %92 = vector.shape_cast %91 : vector<1x1x128xf32> to vector<1x128xf32>
      %93 = vector.broadcast %92 : vector<1x128xf32> to vector<128x128xf32>
      %94 = arith.addf %90, %93 : vector<128x128xf32>
      %c0_64 = arith.constant 0 : index
      %c0_65 = arith.constant 0 : index
      %95 = vector.load %arg8[%c0_64, %c0_65] : memref<128x128xf32, #tpu.memory_space<vmem>>, vector<128x128xf32>
      tpu.vector_store %arg8[%c0_64, %c0_65], %94 {strides = array<i32>} : memref<128x128xf32, #tpu.memory_space<vmem>>, vector<128x128xf32>,
    } else {
    }
    return
  }
  func.func @transform_0(%arg0: i32) -> (i32, i32) {
    %c0_i32 = arith.constant 0 : i32
    %c0_i32_0 = arith.constant 0 : i32
    %c0_i32_1 = arith.constant 0 : i32
    return %c0_i32, %c0_i32_0 : i32, i32
  }
  func.func @transform_1(%arg0: i32) -> (i32, i32) {
    %c0_i32 = arith.constant 0 : i32
    %c0_i32_0 = arith.constant 0 : i32
    return %arg0, %c0_i32 : i32, i32
  }
  func.func @transform_2(%arg0: i32) -> (i32, i32) {
    %c0_i32 = arith.constant 0 : i32
    %c0_i32_0 = arith.constant 0 : i32
    return %arg0, %c0_i32 : i32, i32
  }
  func.func @transform_3(%arg0: i32) -> (i32, i32) {
    %c0_i32 = arith.constant 0 : i32
    %c0_i32_0 = arith.constant 0 : i32
    return %c0_i32, %arg0 : i32, i32
  }
  func.func @transform_4(%arg0: i32) -> (i32, i32, i32) {
    %c0_i32 = arith.constant 0 : i32
    %c0_i32_0 = arith.constant 0 : i32
    %c0_i32_1 = arith.constant 0 : i32
    %c0_i32_2 = arith.constant 0 : i32
    return %c0_i32, %c0_i32_0, %c0_i32_1 : i32, i32, i32
  }
  func.func @transform_5(%arg0: i32) -> (i32, i32, i32) {
    %c0_i32 = arith.constant 0 : i32
    %c0_i32_0 = arith.constant 0 : i32
    %c0_i32_1 = arith.constant 0 : i32
    %c0_i32_2 = arith.constant 0 : i32
    return %c0_i32, %c0_i32_0, %c0_i32_1 : i32, i32, i32
  }
  func.func @transform_6(%arg0: i32) -> (i32, i32, i32) {
    %c0_i32 = arith.constant 0 : i32
    %c0_i32_0 = arith.constant 0 : i32
    %c0_i32_1 = arith.constant 0 : i32
    %c0_i32_2 = arith.constant 0 : i32
    return %c0_i32, %c0_i32_0, %c0_i32_1 : i32, i32, i32
  }
  func.func @transform_7(%arg0: i32) -> (i32, i32) {
    %c0_i32 = arith.constant 0 : i32
    %c0_i32_0 = arith.constant 0 : i32
    %c0_i32_1 = arith.constant 0 : i32
    return %c0_i32, %c0_i32_0 : i32, i32
  }
}

</mosaic_0001>

<llo_original>
// kernel: tpu_custom_call.1
$region0: #{tpu_custom_call.1}
  #allocation0 [shape = 'u32[]', space=smem, size = 0x4, offset = 0x4, fixed_abs, tag = 'smem constant byte address 0x4 - core index']
  #allocation1 [shape = 'u32[144,128]{1,0:T(1,128)}', space=vmem, size = 0x12000, scoped, tag = 'internal scratch']
  %s0 = inlined_call_operand.vmem [shape: bf16[128,128], index: 0, kind: input, shape index: {}]
  %s1 = inlined_call_operand.vmem [shape: bf16[128,128], index: 1, kind: input, shape index: {}]
  %s2 = inlined_call_operand.vmem [shape: s32[128,1], index: 2, kind: input, shape index: {}]
  %s3 = inlined_call_operand.hbm [shape: s32[1,128], index: 3, kind: input, shape index: {}]
  %s4 = inlined_call_operand.hbm [shape: bf16[2,256,128], index: 4, kind: input, shape index: {}]
  %s5 = inlined_call_operand.hbm [shape: bf16[4,128,128], index: 5, kind: input, shape index: {}]
  %s6 = inlined_call_operand.vmem [shape: f32[6,1,128], index: 6, kind: input, shape index: {}]
  %s7 = inlined_call_operand.hbm [shape: f32[128,128], index: 7, kind: output, shape index: {}]
  %s8 = sld [smem:[#allocation0]]
  $region58: #{tpu_custom_call.1} parent=0
    _
  %s10 = ssub.s32 1, %s8
  %s11 = scalar_select 0, %s10, %s8
  $region1: #{tpu_custom_call.1} parent=0
    #allocation2 [shape = 'u8[512]{0}', space=vmem, size = 0x400, scoped, tag = 'input window, operand 3, single buffered']
    #allocation3 [shape = 's32[1]{0}', space=sflag, size = 0x4, scoped, tag = 'scoped memory for tpu_custom_call.1']
    #allocation4 [shape = 's32[1]{0}', space=sflag, size = 0x4, scoped, tag = 'scoped memory for tpu_custom_call.1']
    #allocation5 [shape = 'u8[131072]{0}', space=vmem, size = 0x20000, scoped, tag = 'input window, operand 4, single buffered']
    #allocation6 [shape = 's32[1]{0}', space=sflag, size = 0x4, scoped, tag = 'scoped memory for tpu_custom_call.1']
    #allocation7 [shape = 'u8[131072]{0}', space=vmem, size = 0x20000, scoped, tag = 'input window, operand 5, single buffered']
    #allocation8 [shape = 'u8[65536]{0}', space=vmem, size = 0x10000, scoped, tag = 'output window, operand 0, single buffered']
    %12 = vsyncpa [#allocation3], 0
    %13 = vsyncpa [#allocation6], 0
    %14 = vsyncpa [#allocation4], 0
    // Predicated region
    $region2: #{tpu_custom_call.1} parent=1 // pred_check
      _
    $region3: #{tpu_custom_call.1} parent=1 // pred_check_branch
      %16 = sbr.rel (0) target = $region5
    $region4: #{tpu_custom_call.1} parent=1 // pred_region
      _
    $region5: #{tpu_custom_call.1} parent=1 // pred_fallthru
      _
    // Predicated region
    $region6: #{tpu_custom_call.1} parent=1 // pred_check
      _
    $region7: #{tpu_custom_call.1} parent=1 // pred_check_branch
      %18 = sbr.rel (0) target = $region9
    $region8: #{tpu_custom_call.1} parent=1 // pred_region
      _
    $region9: #{tpu_custom_call.1} parent=1 // pred_fallthru
      _
    // Predicated region
    $region10: #{tpu_custom_call.1} parent=1 // pred_check
      _
    $region11: #{tpu_custom_call.1} parent=1 // pred_check_branch
      %20 = sbr.rel (0) target = $region13
    $region12: #{tpu_custom_call.1} parent=1 // pred_region
      _
    $region13: #{tpu_custom_call.1} parent=1 // pred_fallthru
      _
    // Predicated region
    $region14: #{tpu_custom_call.1} parent=1 // pred_check
      _
    $region15: #{tpu_custom_call.1} parent=1 // pred_check_branch
      %22 = sbr.rel (0) target = $region17
    $region16: #{tpu_custom_call.1} parent=1 // pred_region
      %s24 = ssub.s32 16, 16
      %25 = vsyncadd [#allocation3], %s24
      %s27 = sshll.u32 [#allocation2], 4
      %s28 = int_to_ptr.vmem [resolvable:$true] %s27
      %30 = dma.hbm_to_vmem [thread:$0]  %s3, 16, %s28, [#allocation3]
    $region17: #{tpu_custom_call.1} parent=1 // pred_fallthru
      _
    // Predicated region
    $region18: #{tpu_custom_call.1} parent=1 // pred_check
      _
    $region19: #{tpu_custom_call.1} parent=1 // pred_check_branch
      %32 = sbr.rel (0) target = $region21
    $region20: #{tpu_custom_call.1} parent=1 // pred_region
      %s34 = ssub.s32 4096, 4096
      %35 = vsyncadd [#allocation6], %s34
      %s36 = sshll.u32 [#allocation5], 4
      %s37 = int_to_ptr.vmem [resolvable:$true] %s36
      %42 = dma.hbm_to_vmem [thread:$0]  %s4, 4096, %s37, [#allocation6], 64, 64, 4
    $region21: #{tpu_custom_call.1} parent=1 // pred_fallthru
      _
    // Predicated region
    $region22: #{tpu_custom_call.1} parent=1 // pred_check
      _
    $region23: #{tpu_custom_call.1} parent=1 // pred_check_branch
      %44 = sbr.rel (0) target = $region25
    $region24: #{tpu_custom_call.1} parent=1 // pred_region
      %s46 = ssub.s32 4096, 4096
      %47 = vsyncadd [#allocation6], %s46
      %s48 = sshll.u32 [#allocation7], 4
      %s49 = int_to_ptr.vmem [resolvable:$true] %s48
      %54 = dma.hbm_to_vmem [thread:$0]  %s5, 4096, %s49, [#allocation6], 64, 64, 4
    $region25: #{tpu_custom_call.1} parent=1 // pred_fallthru
      _
    // Predicated region
    $region26: #{tpu_custom_call.1} parent=1 // pred_check
      _
    $region27: #{tpu_custom_call.1} parent=1 // pred_check_branch
      %56 = sbr.rel (0) target = $region29
    $region28: #{tpu_custom_call.1} parent=1 // pred_region
      _
    $region29: #{tpu_custom_call.1} parent=1 // pred_fallthru
      _
    // Predicated region
    $region30: #{tpu_custom_call.1} parent=1 // pred_check
      _
    $region31: #{tpu_custom_call.1} parent=1 // pred_check_branch
      %58 = sbr.rel (0) target = $region33
    $region32: #{tpu_custom_call.1} parent=1 // pred_region
      %59 = dma.done [#allocation3], 16
    $region33: #{tpu_custom_call.1} parent=1 // pred_fallthru
      _
    // Predicated region
    $region34: #{tpu_custom_call.1} parent=1 // pred_check
      _
    $region35: #{tpu_custom_call.1} parent=1 // pred_check_branch
      %61 = sbr.rel (0) target = $region37
    $region36: #{tpu_custom_call.1} parent=1 // pred_region
      %62 = dma.done [#allocation6], 4096
    $region37: #{tpu_custom_call.1} parent=1 // pred_fallthru
      _
    // Predicated region
    $region38: #{tpu_custom_call.1} parent=1 // pred_check
      _
    $region39: #{tpu_custom_call.1} parent=1 // pred_check_branch
      %64 = sbr.rel (0) target = $region41
    $region40: #{tpu_custom_call.1} parent=1 // pred_region
      %65 = dma.done [#allocation6], 4096
    $region41: #{tpu_custom_call.1} parent=1 // pred_fallthru
      _
    %p67 = scmp.eq.s32.totalorder 0, 0
    // Predicated region
    $region42: #{tpu_custom_call.1} parent=1 // pred_check
      %p68 = pneg %p67
    $region43: #{tpu_custom_call.1} parent=1 // pred_check_branch
      %70 = sbr.rel (%p68) target = $region45
    $region44: #{tpu_custom_call.1} parent=1 // pred_region
      %71 = vst [vmem:[#allocation8] sm:$0xff] 0.0
      %72 = vst [vmem:[#allocation8 + $0x8] sm:$0xff] 0.0
      %73 = vst [vmem:[#allocation8 + $0x10] sm:$0xff] 0.0
      %74 = vst [vmem:[#allocation8 + $0x18] sm:$0xff] 0.0
      %75 = vst [vmem:[#allocation8 + $0x20] sm:$0xff] 0.0
      %76 = vst [vmem:[#allocation8 + $0x28] sm:$0xff] 0.0
      %77 = vst [vmem:[#allocation8 + $0x30] sm:$0xff] 0.0
      %78 = vst [vmem:[#allocation8 + $0x38] sm:$0xff] 0.0
      %79 = vst [vmem:[#allocation8 + $0x40] sm:$0xff] 0.0
      %80 = vst [vmem:[#allocation8 + $0x48] sm:$0xff] 0.0
      %81 = vst [vmem:[#allocation8 + $0x50] sm:$0xff] 0.0
      %82 = vst [vmem:[#allocation8 + $0x58] sm:$0xff] 0.0
      %83 = vst [vmem:[#allocation8 + $0x60] sm:$0xff] 0.0
      %84 = vst [vmem:[#allocation8 + $0x68] sm:$0xff] 0.0
      %85 = vst [vmem:[#allocation8 + $0x70] sm:$0xff] 0.0
      %86 = vst [vmem:[#allocation8 + $0x78] sm:$0xff] 0.0
    $region45: #{tpu_custom_call.1} parent=1 // pred_fallthru
      _
    %v87 = vld [vmem:[%s0] sm:$0xf]
    %v88 = vld [vmem:[%s0 + $0x4] sm:$0xf]
    %v89 = vld [vmem:[%s0 + $0x8] sm:$0xf]
    %v90 = vld [vmem:[%s0 + $0xc] sm:$0xf]
    %v91 = vld [vmem:[%s0 + $0x10] sm:$0xf]
    %v92 = vld [vmem:[%s0 + $0x14] sm:$0xf]
    %v93 = vld [vmem:[%s0 + $0x18] sm:$0xf]
    %v94 = vld [vmem:[%s0 + $0x1c] sm:$0xf]
    %v95 = vld [vmem:[%s0 + $0x20] sm:$0xf]
    %v96 = vld [vmem:[%s0 + $0x24] sm:$0xf]
    %v97 = vld [vmem:[%s0 + $0x28] sm:$0xf]
    %v98 = vld [vmem:[%s0 + $0x2c] sm:$0xf]
    %v99 = vld [vmem:[%s0 + $0x30] sm:$0xf]
    %v100 = vld [vmem:[%s0 + $0x34] sm:$0xf]
    %v101 = vld [vmem:[%s0 + $0x38] sm:$0xf]
    %v102 = vld [vmem:[%s0 + $0x3c] sm:$0xf]
    %v103 = vld [vmem:[%s1] sm:$0xf]
    %v104 = vld [vmem:[%s1 + $0x4] sm:$0xf]
    %v105 = vld [vmem:[%s1 + $0x8] sm:$0xf]
    %v106 = vld [vmem:[%s1 + $0xc] sm:$0xf]
    %v107 = vld [vmem:[%s1 + $0x10] sm:$0xf]
    %v108 = vld [vmem:[%s1 + $0x14] sm:$0xf]
    %v109 = vld [vmem:[%s1 + $0x18] sm:$0xf]
    %v110 = vld [vmem:[%s1 + $0x1c] sm:$0xf]
    %v111 = vld [vmem:[%s1 + $0x20] sm:$0xf]
    %v112 = vld [vmem:[%s1 + $0x24] sm:$0xf]
    %v113 = vld [vmem:[%s1 + $0x28] sm:$0xf]
    %v114 = vld [vmem:[%s1 + $0x2c] sm:$0xf]
    %v115 = vld [vmem:[%s1 + $0x30] sm:$0xf]
    %v116 = vld [vmem:[%s1 + $0x34] sm:$0xf]
    %v117 = vld [vmem:[%s1 + $0x38] sm:$0xf]
    %v118 = vld [vmem:[%s1 + $0x3c] sm:$0xf]
    %v119 = vld [vmem:[%s2] sm:$0xff]
    %v120 = vld [vmem:[%s2 + $0x8] sm:$0xff]
    %v121 = vld [vmem:[%s2 + $0x10] sm:$0xff]
    %v122 = vld [vmem:[%s2 + $0x18] sm:$0xff]
    %v123 = vld [vmem:[%s2 + $0x20] sm:$0xff]
    %v124 = vld [vmem:[%s2 + $0x28] sm:$0xff]
    %v125 = vld [vmem:[%s2 + $0x30] sm:$0xff]
    %v126 = vld [vmem:[%s2 + $0x38] sm:$0xff]
    %v127 = vld [vmem:[%s2 + $0x40] sm:$0xff]
    %v128 = vld [vmem:[%s2 + $0x48] sm:$0xff]
    %v129 = vld [vmem:[%s2 + $0x50] sm:$0xff]
    %v130 = vld [vmem:[%s2 + $0x58] sm:$0xff]
    %v131 = vld [vmem:[%s2 + $0x60] sm:$0xff]
    %v132 = vld [vmem:[%s2 + $0x68] sm:$0xff]
    %v133 = vld [vmem:[%s2 + $0x70] sm:$0xff]
    %v134 = vld [vmem:[%s2 + $0x78] sm:$0xff]
    %v135 = vld [vmem:[#allocation2] sm:$0x1]
    %v136 = vlaneseq
    %v137 = vand.u32 %v136, 127
    %138 = vset.pattern.permute.xlu0 0
    %139 = vperm.xlu0 %138, %v119
    %v140 = vpop.permute.xlu0 %139
    %141 = vset.pattern.permute.xlu0 0
    %142 = vperm.xlu0 %141, %v120
    %v143 = vpop.permute.xlu0 %142
    %144 = vset.pattern.permute.xlu0 0
    %145 = vperm.xlu0 %144, %v121
    %v146 = vpop.permute.xlu0 %145
    %147 = vset.pattern.permute.xlu0 0
    %148 = vperm.xlu0 %147, %v122
    %v149 = vpop.permute.xlu0 %148
    %150 = vset.pattern.permute.xlu0 0
    %151 = vperm.xlu0 %150, %v123
    %v152 = vpop.permute.xlu0 %151
    %153 = vset.pattern.permute.xlu0 0
    %154 = vperm.xlu0 %153, %v124
    %v155 = vpop.permute.xlu0 %154
    %156 = vset.pattern.permute.xlu0 0
    %157 = vperm.xlu0 %156, %v125
    %v158 = vpop.permute.xlu0 %157
    %159 = vset.pattern.permute.xlu0 0
    %160 = vperm.xlu0 %159, %v126
    %v161 = vpop.permute.xlu0 %160
    %162 = vset.pattern.permute.xlu0 0
    %163 = vperm.xlu0 %162, %v127
    %v164 = vpop.permute.xlu0 %163
    %165 = vset.pattern.permute.xlu0 0
    %166 = vperm.xlu0 %165, %v128
    %v167 = vpop.permute.xlu0 %166
    %168 = vset.pattern.permute.xlu0 0
    %169 = vperm.xlu0 %168, %v129
    %v170 = vpop.permute.xlu0 %169
    %171 = vset.pattern.permute.xlu0 0
    %172 = vperm.xlu0 %171, %v130
    %v173 = vpop.permute.xlu0 %172
    %174 = vset.pattern.permute.xlu0 0
    %175 = vperm.xlu0 %174, %v131
    %v176 = vpop.permute.xlu0 %175
    %177 = vset.pattern.permute.xlu0 0
    %178 = vperm.xlu0 %177, %v132
    %v179 = vpop.permute.xlu0 %178
    %180 = vset.pattern.permute.xlu0 0
    %181 = vperm.xlu0 %180, %v133
    %v182 = vpop.permute.xlu0 %181
    %183 = vset.pattern.permute.xlu0 0
    %184 = vperm.xlu0 %183, %v134
    %v185 = vpop.permute.xlu0 %184
    %vm186 = vcmp.eq.s32.totalorder %v137, %v140
    %vm187 = vcmp.eq.s32.totalorder %v137, %v143
    %vm188 = vcmp.eq.s32.totalorder %v137, %v146
    %vm189 = vcmp.eq.s32.totalorder %v137, %v149
    %vm190 = vcmp.eq.s32.totalorder %v137, %v152
    %vm191 = vcmp.eq.s32.totalorder %v137, %v155
    %vm192 = vcmp.eq.s32.totalorder %v137, %v158
    %vm193 = vcmp.eq.s32.totalorder %v137, %v161
    %vm194 = vcmp.eq.s32.totalorder %v137, %v164
    %vm195 = vcmp.eq.s32.totalorder %v137, %v167
    %vm196 = vcmp.eq.s32.totalorder %v137, %v170
    %vm197 = vcmp.eq.s32.totalorder %v137, %v173
    %vm198 = vcmp.eq.s32.totalorder %v137, %v176
    %vm199 = vcmp.eq.s32.totalorder %v137, %v179
    %vm200 = vcmp.eq.s32.totalorder %v137, %v182
    %vm201 = vcmp.eq.s32.totalorder %v137, %v185
    %v202 = vsel %vm186, 1.0, 0.0
    %v203 = vsel %vm187, 1.0, 0.0
    %v204 = vsel %vm188, 1.0, 0.0
    %v205 = vsel %vm189, 1.0, 0.0
    %v206 = vsel %vm190, 1.0, 0.0
    %v207 = vsel %vm191, 1.0, 0.0
    %v208 = vsel %vm192, 1.0, 0.0
    %v209 = vsel %vm193, 1.0, 0.0
    %v210 = vsel %vm194, 1.0, 0.0
    %v211 = vsel %vm195, 1.0, 0.0
    %v212 = vsel %vm196, 1.0, 0.0
    %v213 = vsel %vm197, 1.0, 0.0
    %v214 = vsel %vm198, 1.0, 0.0
    %v215 = vsel %vm199, 1.0, 0.0
    %v216 = vsel %vm200, 1.0, 0.0
    %v217 = vsel %vm201, 1.0, 0.0
    %v218 = vpack.c.bf16 %v203, %v202
    %v219 = vpack.c.bf16 %v205, %v204
    %v220 = vpack.c.bf16 %v207, %v206
    %v221 = vpack.c.bf16 %v209, %v208
    %v222 = vpack.c.bf16 %v211, %v210
    %v223 = vpack.c.bf16 %v213, %v212
    %v224 = vpack.c.bf16 %v215, %v214
    %v225 = vpack.c.bf16 %v217, %v216
    %v242 = vunpack.c.l.b16 %v87
    %v243 = vunpack.c.l.b16 %v88
    %v244 = vunpack.c.l.b16 %v89
    %v245 = vunpack.c.l.b16 %v90
    %v246 = vunpack.c.l.b16 %v91
    %v247 = vunpack.c.l.b16 %v92
    %v248 = vunpack.c.l.b16 %v93
    %v249 = vunpack.c.l.b16 %v94
    %v250 = vunpack.c.l.b16 %v95
    %v251 = vunpack.c.l.b16 %v96
    %v252 = vunpack.c.l.b16 %v97
    %v253 = vunpack.c.l.b16 %v98
    %v254 = vunpack.c.l.b16 %v99
    %v255 = vunpack.c.l.b16 %v100
    %v256 = vunpack.c.l.b16 %v101
    %v257 = vunpack.c.l.b16 %v102
    %v258 = vpack.c.b16 %v243, %v242
    %v259 = vpack.c.b16 %v245, %v244
    %v260 = vpack.c.b16 %v247, %v246
    %v261 = vpack.c.b16 %v249, %v248
    %v262 = vpack.c.b16 %v251, %v250
    %v263 = vpack.c.b16 %v253, %v252
    %v264 = vpack.c.b16 %v255, %v254
    %v265 = vpack.c.b16 %v257, %v256
    %274 = vmatprep.subr.bf16.mxu0 0
    %275 = vmatpush1.bf16.msra.mxu0 %v265
    %276 = vmatprep.subr.bf16.mxu0 0
    %277 = vmatpush1.bf16.msra.mxu0 %v264
    %278 = vmatprep.subr.bf16.mxu0 0
    %279 = vmatpush1.bf16.msra.mxu0 %v263
    %280 = vmatprep.subr.bf16.mxu0 0
    %281 = vmatpush1.bf16.msra.mxu0 %v262
    %282 = vmatprep.subr.bf16.mxu0 0
    %283 = vmatpush1.bf16.msra.mxu0 %v261
    %284 = vmatprep.subr.bf16.mxu0 0
    %285 = vmatpush1.bf16.msra.mxu0 %v260
    %286 = vmatprep.subr.bf16.mxu0 0
    %287 = vmatpush1.bf16.msra.mxu0 %v259
    %288 = vmatprep.subr.bf16.mxu0 0
    %289 = vmatpush1.bf16.msra.mxu0 %v258
    %290 = vmatprep.subr.bf16.mxu0 0
    %291 = vmatpush2.bf16.msra.mxu0 0
    %292 = vmatprep.subr.bf16.mxu0 0
    %293 = vmatpush2.bf16.msra.mxu0 0
    %294 = vmatprep.subr.bf16.mxu0 0
    %295 = vmatpush2.bf16.msra.mxu0 0
    %296 = vmatprep.subr.bf16.mxu0 0
    %297 = vmatpush2.bf16.msra.mxu0 0
    %298 = vmatprep.subr.bf16.mxu0 0
    %299 = vmatpush2.bf16.msra.mxu0 0
    %300 = vmatprep.subr.bf16.mxu0 0
    %301 = vmatpush2.bf16.msra.mxu0 0
    %302 = vmatprep.subr.bf16.mxu0 0
    %303 = vmatpush2.bf16.msra.mxu0 0
    %304 = vmatprep.subr.bf16.mxu0 0
    %305 = vmatpush2.bf16.msra.mxu0 0
    %306 = vmatprep.mubr.bf16.mxu0 0
    %307 = vmatmul.mubr.bf16.gmra.mxu0 %v218
    %v308 = vpop.f32.mrf.mxu0
    %v309 = vadd.f32 0.0, %v308
    %v310 = vpop.f32.mrf.mxu0
    %v311 = vpop.f32.mrf.mxu0
    %v312 = vadd.f32 0.0, %v311
    %v313 = vpop.f32.mrf.mxu0
    %314 = vmatprep.mubr.bf16.mxu0 0
    %315 = vmatmul.mubr.bf16.gmra.mxu0 %v219
    %v316 = vpop.f32.mrf.mxu0
    %v317 = vadd.f32 0.0, %v316
    %v318 = vpop.f32.mrf.mxu0
    %v319 = vpop.f32.mrf.mxu0
    %v320 = vadd.f32 0.0, %v319
    %v321 = vpop.f32.mrf.mxu0
    %322 = vmatprep.mubr.bf16.mxu0 0
    %323 = vmatmul.mubr.bf16.gmra.mxu0 %v220
    %v324 = vpop.f32.mrf.mxu0
    %v325 = vadd.f32 0.0, %v324
    %v326 = vpop.f32.mrf.mxu0
    %v327 = vpop.f32.mrf.mxu0
    %v328 = vadd.f32 0.0, %v327
    %v329 = vpop.f32.mrf.mxu0
    %330 = vmatprep.mubr.bf16.mxu0 0
    %331 = vmatmul.mubr.bf16.gmra.mxu0 %v221
    %v332 = vpop.f32.mrf.mxu0
    %v333 = vadd.f32 0.0, %v332
    %v334 = vpop.f32.mrf.mxu0
    %v335 = vpop.f32.mrf.mxu0
    %v336 = vadd.f32 0.0, %v335
    %v337 = vpop.f32.mrf.mxu0
    %338 = vmatprep.mubr.bf16.mxu0 0
    %339 = vmatmul.mubr.bf16.gmra.mxu0 %v222
    %v340 = vpop.f32.mrf.mxu0
    %v341 = vadd.f32 0.0, %v340
    %v342 = vpop.f32.mrf.mxu0
    %v343 = vpop.f32.mrf.mxu0
    %v344 = vadd.f32 0.0, %v343
    %v345 = vpop.f32.mrf.mxu0
    %346 = vmatprep.mubr.bf16.mxu0 0
    %347 = vmatmul.mubr.bf16.gmra.mxu0 %v223
    %v348 = vpop.f32.mrf.mxu0
    %v349 = vadd.f32 0.0, %v348
    %v350 = vpop.f32.mrf.mxu0
    %v351 = vpop.f32.mrf.mxu0
    %v352 = vadd.f32 0.0, %v351
    %v353 = vpop.f32.mrf.mxu0
    %354 = vmatprep.mubr.bf16.mxu0 0
    %355 = vmatmul.mubr.bf16.gmra.mxu0 %v224
    %v356 = vpop.f32.mrf.mxu0
    %v357 = vadd.f32 0.0, %v356
    %v358 = vpop.f32.mrf.mxu0
    %v359 = vpop.f32.mrf.mxu0
    %v360 = vadd.f32 0.0, %v359
    %v361 = vpop.f32.mrf.mxu0
    %362 = vmatprep.mubr.bf16.mxu0 0
    %363 = vmatmul.mubr.bf16.gmra.mxu0 %v225
    %v364 = vpop.f32.mrf.mxu0
    %v365 = vadd.f32 0.0, %v364
    %v366 = vpop.f32.mrf.mxu0
    %v367 = vpop.f32.mrf.mxu0
    %v368 = vadd.f32 0.0, %v367
    %v369 = vpop.f32.mrf.mxu0
    %370 = vdwg.mxu0
    %v371 = vpack.c.bf16 %v312, %v309
    %v372 = vpack.c.bf16 %v320, %v317
    %v373 = vpack.c.bf16 %v328, %v325
    %v374 = vpack.c.bf16 %v336, %v333
    %v375 = vpack.c.bf16 %v344, %v341
    %v376 = vpack.c.bf16 %v352, %v349
    %v377 = vpack.c.bf16 %v360, %v357
    %v378 = vpack.c.bf16 %v368, %v365
    %v395 = vunpack.c.l.b16 %v103
    %v396 = vunpack.c.l.b16 %v104
    %v397 = vunpack.c.l.b16 %v105
    %v398 = vunpack.c.l.b16 %v106
    %v399 = vunpack.c.l.b16 %v107
    %v400 = vunpack.c.l.b16 %v108
    %v401 = vunpack.c.l.b16 %v109
    %v402 = vunpack.c.l.b16 %v110
    %v403 = vunpack.c.l.b16 %v111
    %v404 = vunpack.c.l.b16 %v112
    %v405 = vunpack.c.l.b16 %v113
    %v406 = vunpack.c.l.b16 %v114
    %v407 = vunpack.c.l.b16 %v115
    %v408 = vunpack.c.l.b16 %v116
    %v409 = vunpack.c.l.b16 %v117
    %v410 = vunpack.c.l.b16 %v118
    %v411 = vpack.c.b16 %v396, %v395
    %v412 = vpack.c.b16 %v398, %v397
    %v413 = vpack.c.b16 %v400, %v399
    %v414 = vpack.c.b16 %v402, %v401
    %v415 = vpack.c.b16 %v404, %v403
    %v416 = vpack.c.b16 %v406, %v405
    %v417 = vpack.c.b16 %v408, %v407
    %v418 = vpack.c.b16 %v410, %v409
    %v427 = vld [vmem:[#allocation5] sm:$0xf]
    %v428 = vld [vmem:[#allocation5 + $0x4] sm:$0xf]
    %v429 = vld [vmem:[#allocation5 + $0x8] sm:$0xf]
    %v430 = vld [vmem:[#allocation5 + $0xc] sm:$0xf]
    %v431 = vld [vmem:[#allocation5 + $0x10] sm:$0xf]
    %v432 = vld [vmem:[#allocation5 + $0x14] sm:$0xf]
    %v433 = vld [vmem:[#allocation5 + $0x18] sm:$0xf]
    %v434 = vld [vmem:[#allocation5 + $0x1c] sm:$0xf]
    %v435 = vld [vmem:[#allocation5 + $0x20] sm:$0xf]
    %v436 = vld [vmem:[#allocation5 + $0x24] sm:$0xf]
    %v437 = vld [vmem:[#allocation5 + $0x28] sm:$0xf]
    %v438 = vld [vmem:[#allocation5 + $0x2c] sm:$0xf]
    %v439 = vld [vmem:[#allocation5 + $0x30] sm:$0xf]
    %v440 = vld [vmem:[#allocation5 + $0x34] sm:$0xf]
    %v441 = vld [vmem:[#allocation5 + $0x38] sm:$0xf]
    %v442 = vld [vmem:[#allocation5 + $0x3c] sm:$0xf]
    %v443 = vld [vmem:[#allocation5 + $0x40] sm:$0xf]
    %v444 = vld [vmem:[#allocation5 + $0x44] sm:$0xf]
    %v445 = vld [vmem:[#allocation5 + $0x48] sm:$0xf]
    %v446 = vld [vmem:[#allocation5 + $0x4c] sm:$0xf]
    %v447 = vld [vmem:[#allocation5 + $0x50] sm:$0xf]
    %v448 = vld [vmem:[#allocation5 + $0x54] sm:$0xf]
    %v449 = vld [vmem:[#allocation5 + $0x58] sm:$0xf]
    %v450 = vld [vmem:[#allocation5 + $0x5c] sm:$0xf]
    %v451 = vld [vmem:[#allocation5 + $0x60] sm:$0xf]
    %v452 = vld [vmem:[#allocation5 + $0x64] sm:$0xf]
    %v453 = vld [vmem:[#allocation5 + $0x68] sm:$0xf]
    %v454 = vld [vmem:[#allocation5 + $0x6c] sm:$0xf]
    %v455 = vld [vmem:[#allocation5 + $0x70] sm:$0xf]
    %v456 = vld [vmem:[#allocation5 + $0x74] sm:$0xf]
    %v457 = vld [vmem:[#allocation5 + $0x78] sm:$0xf]
    %v458 = vld [vmem:[#allocation5 + $0x7c] sm:$0xf]
    %v459 = vld [vmem:[%s6] sm:$0x1]
    %v461 = vlaneseq
    %v462 = vshrl.u32 %v461, 7
    %v463 = vsub.s32 0, %v462
    %v464 = vrot.slane %v459, %v463
    %v498 = vunpack.c.l.b16 %v427
    %v499 = vunpack.c.l.b16 %v428
    %v500 = vunpack.c.l.b16 %v429
    %v501 = vunpack.c.l.b16 %v430
    %v502 = vunpack.c.l.b16 %v431
    %v503 = vunpack.c.l.b16 %v432
    %v504 = vunpack.c.l.b16 %v433
    %v505 = vunpack.c.l.b16 %v434
    %v506 = vunpack.c.l.b16 %v435
    %v507 = vunpack.c.l.b16 %v436
    %v508 = vunpack.c.l.b16 %v437
    %v509 = vunpack.c.l.b16 %v438
    %v510 = vunpack.c.l.b16 %v439
    %v511 = vunpack.c.l.b16 %v440
    %v512 = vunpack.c.l.b16 %v441
    %v513 = vunpack.c.l.b16 %v442
    %v514 = vunpack.c.l.b16 %v443
    %v515 = vunpack.c.l.b16 %v444
    %v516 = vunpack.c.l.b16 %v445
    %v517 = vunpack.c.l.b16 %v446
    %v518 = vunpack.c.l.b16 %v447
    %v519 = vunpack.c.l.b16 %v448
    %v520 = vunpack.c.l.b16 %v449
    %v521 = vunpack.c.l.b16 %v450
    %v522 = vunpack.c.l.b16 %v451
    %v523 = vunpack.c.l.b16 %v452
    %v524 = vunpack.c.l.b16 %v453
    %v525 = vunpack.c.l.b16 %v454
    %v526 = vunpack.c.l.b16 %v455
    %v527 = vunpack.c.l.b16 %v456
    %v528 = vunpack.c.l.b16 %v457
    %v529 = vunpack.c.l.b16 %v458
    %v530 = vpack.c.b16 %v499, %v498
    %v531 = vpack.c.b16 %v501, %v500
    %v532 = vpack.c.b16 %v503, %v502
    %v533 = vpack.c.b16 %v505, %v504
    %v534 = vpack.c.b16 %v507, %v506
    %v535 = vpack.c.b16 %v509, %v508
    %v536 = vpack.c.b16 %v511, %v510
    %v537 = vpack.c.b16 %v513, %v512
    %v538 = vpack.c.b16 %v515, %v514
    %v539 = vpack.c.b16 %v517, %v516
    %v540 = vpack.c.b16 %v519, %v518
    %v541 = vpack.c.b16 %v521, %v520
    %v542 = vpack.c.b16 %v523, %v522
    %v543 = vpack.c.b16 %v525, %v524
    %v544 = vpack.c.b16 %v527, %v526
    %v545 = vpack.c.b16 %v529, %v528
    %562 = vmatprep.subr.bf16.mxu0 0
    %563 = vmatpush1.bf16.msra.mxu0 %v537
    %564 = vmatprep.subr.bf16.mxu0 0
    %565 = vmatpush1.bf16.msra.mxu0 %v536
    %566 = vmatprep.subr.bf16.mxu0 0
    %567 = vmatpush1.bf16.msra.mxu0 %v535
    %568 = vmatprep.subr.bf16.mxu0 0
    %569 = vmatpush1.bf16.msra.mxu0 %v534
    %570 = vmatprep.subr.bf16.mxu0 0
    %571 = vmatpush1.bf16.msra.mxu0 %v533
    %572 = vmatprep.subr.bf16.mxu0 0
    %573 = vmatpush1.bf16.msra.mxu0 %v532
    %574 = vmatprep.subr.bf16.mxu0 0
    %575 = vmatpush1.bf16.msra.mxu0 %v531
    %576 = vmatprep.subr.bf16.mxu0 0
    %577 = vmatpush1.bf16.msra.mxu0 %v530
    %578 = vmatprep.subr.bf16.mxu0 0
    %579 = vmatpush2.bf16.msra.mxu0 %v545
    %580 = vmatprep.subr.bf16.mxu0 0
    %581 = vmatpush2.bf16.msra.mxu0 %v544
    %582 = vmatprep.subr.bf16.mxu0 0
    %583 = vmatpush2.bf16.msra.mxu0 %v543
    %584 = vmatprep.subr.bf16.mxu0 0
    %585 = vmatpush2.bf16.msra.mxu0 %v542
    %586 = vmatprep.subr.bf16.mxu0 0
    %587 = vmatpush2.bf16.msra.mxu0 %v541
    %588 = vmatprep.subr.bf16.mxu0 0
    %589 = vmatpush2.bf16.msra.mxu0 %v540
    %590 = vmatprep.subr.bf16.mxu0 0
    %591 = vmatpush2.bf16.msra.mxu0 %v539
    %592 = vmatprep.subr.bf16.mxu0 0
    %593 = vmatpush2.bf16.msra.mxu0 %v538
    %594 = vmatprep.mubr.bf16.mxu0 %v411
    %595 = vmatmul.mubr.bf16.gmra.mxu0 %v371
    %v596 = vpop.f32.mrf.mxu0
    %v597 = vadd.f32 %v464, %v596
    %v598 = vpop.f32.mrf.mxu0
    %v599 = vpop.f32.mrf.mxu0
    %v600 = vadd.f32 %v464, %v599
    %v601 = vpop.f32.mrf.mxu0
    %602 = vmatprep.mubr.bf16.mxu0 %v412
    %603 = vmatmul.mubr.bf16.gmra.mxu0 %v372
    %v604 = vpop.f32.mrf.mxu0
    %v605 = vadd.f32 %v464, %v604
    %v606 = vpop.f32.mrf.mxu0
    %v607 = vpop.f32.mrf.mxu0
    %v608 = vadd.f32 %v464, %v607
    %v609 = vpop.f32.mrf.mxu0
    %610 = vmatprep.mubr.bf16.mxu0 %v413
    %611 = vmatmul.mubr.bf16.gmra.mxu0 %v373
    %v612 = vpop.f32.mrf.mxu0
    %v613 = vadd.f32 %v464, %v612
    %v614 = vpop.f32.mrf.mxu0
    %v615 = vpop.f32.mrf.mxu0
    %v616 = vadd.f32 %v464, %v615
    %v617 = vpop.f32.mrf.mxu0
    %618 = vmatprep.mubr.bf16.mxu0 %v414
    %619 = vmatmul.mubr.bf16.gmra.mxu0 %v374
    %v620 = vpop.f32.mrf.mxu0
    %v621 = vadd.f32 %v464, %v620
    %v622 = vpop.f32.mrf.mxu0
    %v623 = vpop.f32.mrf.mxu0
    %v624 = vadd.f32 %v464, %v623
    %v625 = vpop.f32.mrf.mxu0
    %626 = vmatprep.mubr.bf16.mxu0 %v415
    %627 = vmatmul.mubr.bf16.gmra.mxu0 %v375
    %v628 = vpop.f32.mrf.mxu0
    %v629 = vadd.f32 %v464, %v628
    %v630 = vpop.f32.mrf.mxu0
    %v631 = vpop.f32.mrf.mxu0
    %v632 = vadd.f32 %v464, %v631
    %v633 = vpop.f32.mrf.mxu0
    %634 = vmatprep.mubr.bf16.mxu0 %v416
    %635 = vmatmul.mubr.bf16.gmra.mxu0 %v376
    %v636 = vpop.f32.mrf.mxu0
    %v637 = vadd.f32 %v464, %v636
    %v638 = vpop.f32.mrf.mxu0
    %v639 = vpop.f32.mrf.mxu0
    %v640 = vadd.f32 %v464, %v639
    %v641 = vpop.f32.mrf.mxu0
    %642 = vmatprep.mubr.bf16.mxu0 %v417
    %643 = vmatmul.mubr.bf16.gmra.mxu0 %v377
    %v644 = vpop.f32.mrf.mxu0
    %v645 = vadd.f32 %v464, %v644
    %v646 = vpop.f32.mrf.mxu0
    %v647 = vpop.f32.mrf.mxu0
    %v648 = vadd.f32 %v464, %v647
    %v649 = vpop.f32.mrf.mxu0
    %650 = vmatprep.mubr.bf16.mxu0 %v418
    %651 = vmatmul.mubr.bf16.gmra.mxu0 %v378
    %v652 = vpop.f32.mrf.mxu0
    %v653 = vadd.f32 %v464, %v652
    %v654 = vpop.f32.mrf.mxu0
    %v655 = vpop.f32.mrf.mxu0
    %v656 = vadd.f32 %v464, %v655
    %v657 = vpop.f32.mrf.mxu0
    %658 = vdwg.mxu0
    %v659 = vmax.f32 %v597, 0.0
    %v660 = vmax.f32 %v600, 0.0
    %v661 = vmax.f32 %v605, 0.0
    %v662 = vmax.f32 %v608, 0.0
    %v663 = vmax.f32 %v613, 0.0
    %v664 = vmax.f32 %v616, 0.0
    %v665 = vmax.f32 %v621, 0.0
    %v666 = vmax.f32 %v624, 0.0
    %v667 = vmax.f32 %v629, 0.0
    %v668 = vmax.f32 %v632, 0.0
    %v669 = vmax.f32 %v637, 0.0
    %v670 = vmax.f32 %v640, 0.0
    %v671 = vmax.f32 %v645, 0.0
    %v672 = vmax.f32 %v648, 0.0
    %v673 = vmax.f32 %v653, 0.0
    %v674 = vmax.f32 %v656, 0.0
    %v675 = vpack.c.bf16 %v660, %v659
    %v676 = vpack.c.bf16 %v662, %v661
    %v677 = vpack.c.bf16 %v664, %v663
    %v678 = vpack.c.bf16 %v666, %v665
    %v679 = vpack.c.bf16 %v668, %v667
    %v680 = vpack.c.bf16 %v670, %v669
    %v681 = vpack.c.bf16 %v672, %v671
    %v682 = vpack.c.bf16 %v674, %v673
    %v683 = vld [vmem:[#allocation7] sm:$0xf]
    %v684 = vld [vmem:[#allocation7 + $0x4] sm:$0xf]
    %v685 = vld [vmem:[#allocation7 + $0x8] sm:$0xf]
    %v686 = vld [vmem:[#allocation7 + $0xc] sm:$0xf]
    %v687 = vld [vmem:[#allocation7 + $0x10] sm:$0xf]
    %v688 = vld [vmem:[#allocation7 + $0x14] sm:$0xf]
    %v689 = vld [vmem:[#allocation7 + $0x18] sm:$0xf]
    %v690 = vld [vmem:[#allocation7 + $0x1c] sm:$0xf]
    %v691 = vld [vmem:[#allocation7 + $0x20] sm:$0xf]
    %v692 = vld [vmem:[#allocation7 + $0x24] sm:$0xf]
    %v693 = vld [vmem:[#allocation7 + $0x28] sm:$0xf]
    %v694 = vld [vmem:[#allocation7 + $0x2c] sm:$0xf]
    %v695 = vld [vmem:[#allocation7 + $0x30] sm:$0xf]
    %v696 = vld [vmem:[#allocation7 + $0x34] sm:$0xf]
    %v697 = vld [vmem:[#allocation7 + $0x38] sm:$0xf]
    %v698 = vld [vmem:[#allocation7 + $0x3c] sm:$0xf]
    %s699 = scalar_lea.vmem %s6, 1
    %v700 = vld [vmem:[%s699] sm:$0x1]
    %v702 = vlaneseq
    %v703 = vshrl.u32 %v702, 7
    %v704 = vsub.s32 0, %v703
    %v705 = vrot.slane %v700, %v704
    %v723 = vunpack.c.l.b16 %v683
    %v724 = vunpack.c.l.b16 %v684
    %v725 = vunpack.c.l.b16 %v685
    %v726 = vunpack.c.l.b16 %v686
    %v727 = vunpack.c.l.b16 %v687
    %v728 = vunpack.c.l.b16 %v688
    %v729 = vunpack.c.l.b16 %v689
    %v730 = vunpack.c.l.b16 %v690
    %v731 = vunpack.c.l.b16 %v691
    %v732 = vunpack.c.l.b16 %v692
    %v733 = vunpack.c.l.b16 %v693
    %v734 = vunpack.c.l.b16 %v694
    %v735 = vunpack.c.l.b16 %v695
    %v736 = vunpack.c.l.b16 %v696
    %v737 = vunpack.c.l.b16 %v697
    %v738 = vunpack.c.l.b16 %v698
    %v739 = vpack.c.b16 %v724, %v723
    %v740 = vpack.c.b16 %v726, %v725
    %v741 = vpack.c.b16 %v728, %v727
    %v742 = vpack.c.b16 %v730, %v729
    %v743 = vpack.c.b16 %v732, %v731
    %v744 = vpack.c.b16 %v734, %v733
    %v745 = vpack.c.b16 %v736, %v735
    %v746 = vpack.c.b16 %v738, %v737
    %755 = vmatprep.subr.bf16.mxu0 0
    %756 = vmatpush1.bf16.msra.mxu0 %v746
    %757 = vmatprep.subr.bf16.mxu0 0
    %758 = vmatpush1.bf16.msra.mxu0 %v745
    %759 = vmatprep.subr.bf16.mxu0 0
    %760 = vmatpush1.bf16.msra.mxu0 %v744
    %761 = vmatprep.subr.bf16.mxu0 0
    %762 = vmatpush1.bf16.msra.mxu0 %v743
    %763 = vmatprep.subr.bf16.mxu0 0
    %764 = vmatpush1.bf16.msra.mxu0 %v742
    %765 = vmatprep.subr.bf16.mxu0 0
    %766 = vmatpush1.bf16.msra.mxu0 %v741
    %767 = vmatprep.subr.bf16.mxu0 0
    %768 = vmatpush1.bf16.msra.mxu0 %v740
    %769 = vmatprep.subr.bf16.mxu0 0
    %770 = vmatpush1.bf16.msra.mxu0 %v739
    %771 = vmatprep.subr.bf16.mxu0 0
    %772 = vmatpush2.bf16.msra.mxu0 0
    %773 = vmatprep.subr.bf16.mxu0 0
    %774 = vmatpush2.bf16.msra.mxu0 0
    %775 = vmatprep.subr.bf16.mxu0 0
    %776 = vmatpush2.bf16.msra.mxu0 0
    %777 = vmatprep.subr.bf16.mxu0 0
    %778 = vmatpush2.bf16.msra.mxu0 0
    %779 = vmatprep.subr.bf16.mxu0 0
    %780 = vmatpush2.bf16.msra.mxu0 0
    %781 = vmatprep.subr.bf16.mxu0 0
    %782 = vmatpush2.bf16.msra.mxu0 0
    %783 = vmatprep.subr.bf16.mxu0 0
    %784 = vmatpush2.bf16.msra.mxu0 0
    %785 = vmatprep.subr.bf16.mxu0 0
    %786 = vmatpush2.bf16.msra.mxu0 0
    %787 = vmatprep.mubr.bf16.mxu0 0
    %788 = vmatmul.mubr.bf16.gmra.mxu0 %v675
    %v789 = vpop.f32.mrf.mxu0
    %v790 = vadd.f32 %v705, %v789
    %v791 = vpop.f32.mrf.mxu0
    %v792 = vpop.f32.mrf.mxu0
    %v793 = vadd.f32 %v705, %v792
    %v794 = vpop.f32.mrf.mxu0
    %795 = vmatprep.mubr.bf16.mxu0 0
    %796 = vmatmul.mubr.bf16.gmra.mxu0 %v676
    %v797 = vpop.f32.mrf.mxu0
    %v798 = vadd.f32 %v705, %v797
    %v799 = vpop.f32.mrf.mxu0
    %v800 = vpop.f32.mrf.mxu0
    %v801 = vadd.f32 %v705, %v800
    %v802 = vpop.f32.mrf.mxu0
    %803 = vmatprep.mubr.bf16.mxu0 0
    %804 = vmatmul.mubr.bf16.gmra.mxu0 %v677
    %v805 = vpop.f32.mrf.mxu0
    %v806 = vadd.f32 %v705, %v805
    %v807 = vpop.f32.mrf.mxu0
    %v808 = vpop.f32.mrf.mxu0
    %v809 = vadd.f32 %v705, %v808
    %v810 = vpop.f32.mrf.mxu0
    %811 = vmatprep.mubr.bf16.mxu0 0
    %812 = vmatmul.mubr.bf16.gmra.mxu0 %v678
    %v813 = vpop.f32.mrf.mxu0
    %v814 = vadd.f32 %v705, %v813
    %v815 = vpop.f32.mrf.mxu0
    %v816 = vpop.f32.mrf.mxu0
    %v817 = vadd.f32 %v705, %v816
    %v818 = vpop.f32.mrf.mxu0
    %819 = vmatprep.mubr.bf16.mxu0 0
    %820 = vmatmul.mubr.bf16.gmra.mxu0 %v679
    %v821 = vpop.f32.mrf.mxu0
    %v822 = vadd.f32 %v705, %v821
    %v823 = vpop.f32.mrf.mxu0
    %v824 = vpop.f32.mrf.mxu0
    %v825 = vadd.f32 %v705, %v824
    %v826 = vpop.f32.mrf.mxu0
    %827 = vmatprep.mubr.bf16.mxu0 0
    %828 = vmatmul.mubr.bf16.gmra.mxu0 %v680
    %v829 = vpop.f32.mrf.mxu0
    %v830 = vadd.f32 %v705, %v829
    %v831 = vpop.f32.mrf.mxu0
    %v832 = vpop.f32.mrf.mxu0
    %v833 = vadd.f32 %v705, %v832
    %v834 = vpop.f32.mrf.mxu0
    %835 = vmatprep.mubr.bf16.mxu0 0
    %836 = vmatmul.mubr.bf16.gmra.mxu0 %v681
    %v837 = vpop.f32.mrf.mxu0
    %v838 = vadd.f32 %v705, %v837
    %v839 = vpop.f32.mrf.mxu0
    %v840 = vpop.f32.mrf.mxu0
    %v841 = vadd.f32 %v705, %v840
    %v842 = vpop.f32.mrf.mxu0
    %843 = vmatprep.mubr.bf16.mxu0 0
    %844 = vmatmul.mubr.bf16.gmra.mxu0 %v682
    %v845 = vpop.f32.mrf.mxu0
    %v846 = vadd.f32 %v705, %v845
    %v847 = vpop.f32.mrf.mxu0
    %v848 = vpop.f32.mrf.mxu0
    %v849 = vadd.f32 %v705, %v848
    %v850 = vpop.f32.mrf.mxu0
    %851 = vdwg.mxu0
    %v852 = vmax.f32 %v790, 0.0
    %v853 = vmax.f32 %v793, 0.0
    %v854 = vmax.f32 %v798, 0.0
    %v855 = vmax.f32 %v801, 0.0
    %v856 = vmax.f32 %v806, 0.0
    %v857 = vmax.f32 %v809, 0.0
    %v858 = vmax.f32 %v814, 0.0
    %v859 = vmax.f32 %v817, 0.0
    %v860 = vmax.f32 %v822, 0.0
    %v861 = vmax.f32 %v825, 0.0
    %v862 = vmax.f32 %v830, 0.0
    %v863 = vmax.f32 %v833, 0.0
    %v864 = vmax.f32 %v838, 0.0
    %v865 = vmax.f32 %v841, 0.0
    %v866 = vmax.f32 %v846, 0.0
    %v867 = vmax.f32 %v849, 0.0
    %v868 = vpack.c.bf16 %v853, %v852
    %v869 = vpack.c.bf16 %v855, %v854
    %v870 = vpack.c.bf16 %v857, %v856
    %v871 = vpack.c.bf16 %v859, %v858
    %v872 = vpack.c.bf16 %v861, %v860
    %v873 = vpack.c.bf16 %v863, %v862
    %v874 = vpack.c.bf16 %v865, %v864
    %v875 = vpack.c.bf16 %v867, %v866
    %s876 = scalar_lea.vmem [#allocation7], 64
    %v877 = vld [vmem:[%s876] sm:$0xf]
    %v878 = vld [vmem:[%s876 + $0x4] sm:$0xf]
    %v879 = vld [vmem:[%s876 + $0x8] sm:$0xf]
    %v880 = vld [vmem:[%s876 + $0xc] sm:$0xf]
    %v881 = vld [vmem:[%s876 + $0x10] sm:$0xf]
    %v882 = vld [vmem:[%s876 + $0x14] sm:$0xf]
    %v883 = vld [vmem:[%s876 + $0x18] sm:$0xf]
    %v884 = vld [vmem:[%s876 + $0x1c] sm:$0xf]
    %v885 = vld [vmem:[%s876 + $0x20] sm:$0xf]
    %v886 = vld [vmem:[%s876 + $0x24] sm:$0xf]
    %v887 = vld [vmem:[%s876 + $0x28] sm:$0xf]
    %v888 = vld [vmem:[%s876 + $0x2c] sm:$0xf]
    %v889 = vld [vmem:[%s876 + $0x30] sm:$0xf]
    %v890 = vld [vmem:[%s876 + $0x34] sm:$0xf]
    %v891 = vld [vmem:[%s876 + $0x38] sm:$0xf]
    %v892 = vld [vmem:[%s876 + $0x3c] sm:$0xf]
    %s893 = scalar_lea.vmem %s6, 2
    %v894 = vld [vmem:[%s893] sm:$0x1]
    %v896 = vlaneseq
    %v897 = vshrl.u32 %v896, 7
    %v898 = vsub.s32 0, %v897
    %v899 = vrot.slane %v894, %v898
    %v917 = vunpack.c.l.b16 %v877
    %v918 = vunpack.c.l.b16 %v878
    %v919 = vunpack.c.l.b16 %v879
    %v920 = vunpack.c.l.b16 %v880
    %v921 = vunpack.c.l.b16 %v881
    %v922 = vunpack.c.l.b16 %v882
    %v923 = vunpack.c.l.b16 %v883
    %v924 = vunpack.c.l.b16 %v884
    %v925 = vunpack.c.l.b16 %v885
    %v926 = vunpack.c.l.b16 %v886
    %v927 = vunpack.c.l.b16 %v887
    %v928 = vunpack.c.l.b16 %v888
    %v929 = vunpack.c.l.b16 %v889
    %v930 = vunpack.c.l.b16 %v890
    %v931 = vunpack.c.l.b16 %v891
    %v932 = vunpack.c.l.b16 %v892
    %v933 = vpack.c.b16 %v918, %v917
    %v934 = vpack.c.b16 %v920, %v919
    %v935 = vpack.c.b16 %v922, %v921
    %v936 = vpack.c.b16 %v924, %v923
    %v937 = vpack.c.b16 %v926, %v925
    %v938 = vpack.c.b16 %v928, %v927
    %v939 = vpack.c.b16 %v930, %v929
    %v940 = vpack.c.b16 %v932, %v931
    %949 = vmatprep.subr.bf16.mxu0 0
    %950 = vmatpush1.bf16.msra.mxu0 %v940
    %951 = vmatprep.subr.bf16.mxu0 0
    %952 = vmatpush1.bf16.msra.mxu0 %v939
    %953 = vmatprep.subr.bf16.mxu0 0
    %954 = vmatpush1.bf16.msra.mxu0 %v938
    %955 = vmatprep.subr.bf16.mxu0 0
    %956 = vmatpush1.bf16.msra.mxu0 %v937
    %957 = vmatprep.subr.bf16.mxu0 0
    %958 = vmatpush1.bf16.msra.mxu0 %v936
    %959 = vmatprep.subr.bf16.mxu0 0
    %960 = vmatpush1.bf16.msra.mxu0 %v935
    %961 = vmatprep.subr.bf16.mxu0 0
    %962 = vmatpush1.bf16.msra.mxu0 %v934
    %963 = vmatprep.subr.bf16.mxu0 0
    %964 = vmatpush1.bf16.msra.mxu0 %v933
    %965 = vmatprep.subr.bf16.mxu0 0
    %966 = vmatpush2.bf16.msra.mxu0 0
    %967 = vmatprep.subr.bf16.mxu0 0
    %968 = vmatpush2.bf16.msra.mxu0 0
    %969 = vmatprep.subr.bf16.mxu0 0
    %970 = vmatpush2.bf16.msra.mxu0 0
    %971 = vmatprep.subr.bf16.mxu0 0
    %972 = vmatpush2.bf16.msra.mxu0 0
    %973 = vmatprep.subr.bf16.mxu0 0
    %974 = vmatpush2.bf16.msra.mxu0 0
    %975 = vmatprep.subr.bf16.mxu0 0
    %976 = vmatpush2.bf16.msra.mxu0 0
    %977 = vmatprep.subr.bf16.mxu0 0
    %978 = vmatpush2.bf16.msra.mxu0 0
    %979 = vmatprep.subr.bf16.mxu0 0
    %980 = vmatpush2.bf16.msra.mxu0 0
    %981 = vmatprep.mubr.bf16.mxu0 0
    %982 = vmatmul.mubr.bf16.gmra.mxu0 %v868
    %v983 = vpop.f32.mrf.mxu0
    %v984 = vadd.f32 %v899, %v983
    %v985 = vpop.f32.mrf.mxu0
    %v986 = vpop.f32.mrf.mxu0
    %v987 = vadd.f32 %v899, %v986
    %v988 = vpop.f32.mrf.mxu0
    %989 = vmatprep.mubr.bf16.mxu0 0
    %990 = vmatmul.mubr.bf16.gmra.mxu0 %v869
    %v991 = vpop.f32.mrf.mxu0
    %v992 = vadd.f32 %v899, %v991
    %v993 = vpop.f32.mrf.mxu0
    %v994 = vpop.f32.mrf.mxu0
    %v995 = vadd.f32 %v899, %v994
    %v996 = vpop.f32.mrf.mxu0
    %997 = vmatprep.mubr.bf16.mxu0 0
    %998 = vmatmul.mubr.bf16.gmra.mxu0 %v870
    %v999 = vpop.f32.mrf.mxu0
    %v1000 = vadd.f32 %v899, %v999
    %v1001 = vpop.f32.mrf.mxu0
    %v1002 = vpop.f32.mrf.mxu0
    %v1003 = vadd.f32 %v899, %v1002
    %v1004 = vpop.f32.mrf.mxu0
    %1005 = vmatprep.mubr.bf16.mxu0 0
    %1006 = vmatmul.mubr.bf16.gmra.mxu0 %v871
    %v1007 = vpop.f32.mrf.mxu0
    %v1008 = vadd.f32 %v899, %v1007
    %v1009 = vpop.f32.mrf.mxu0
    %v1010 = vpop.f32.mrf.mxu0
    %v1011 = vadd.f32 %v899, %v1010
    %v1012 = vpop.f32.mrf.mxu0
    %1013 = vmatprep.mubr.bf16.mxu0 0
    %1014 = vmatmul.mubr.bf16.gmra.mxu0 %v872
    %v1015 = vpop.f32.mrf.mxu0
    %v1016 = vadd.f32 %v899, %v1015
    %v1017 = vpop.f32.mrf.mxu0
    %v1018 = vpop.f32.mrf.mxu0
    %v1019 = vadd.f32 %v899, %v1018
    %v1020 = vpop.f32.mrf.mxu0
    %1021 = vmatprep.mubr.bf16.mxu0 0
    %1022 = vmatmul.mubr.bf16.gmra.mxu0 %v873
    %v1023 = vpop.f32.mrf.mxu0
    %v1024 = vadd.f32 %v899, %v1023
    %v1025 = vpop.f32.mrf.mxu0
    %v1026 = vpop.f32.mrf.mxu0
    %v1027 = vadd.f32 %v899, %v1026
    %v1028 = vpop.f32.mrf.mxu0
    %1029 = vmatprep.mubr.bf16.mxu0 0
    %1030 = vmatmul.mubr.bf16.gmra.mxu0 %v874
    %v1031 = vpop.f32.mrf.mxu0
    %v1032 = vadd.f32 %v899, %v1031
    %v1033 = vpop.f32.mrf.mxu0
    %v1034 = vpop.f32.mrf.mxu0
    %v1035 = vadd.f32 %v899, %v1034
    %v1036 = vpop.f32.mrf.mxu0
    %1037 = vmatprep.mubr.bf16.mxu0 0
    %1038 = vmatmul.mubr.bf16.gmra.mxu0 %v875
    %v1039 = vpop.f32.mrf.mxu0
    %v1040 = vadd.f32 %v899, %v1039
    %v1041 = vpop.f32.mrf.mxu0
    %v1042 = vpop.f32.mrf.mxu0
    %v1043 = vadd.f32 %v899, %v1042
    %v1044 = vpop.f32.mrf.mxu0
    %1045 = vdwg.mxu0
    %v1046 = vlaneseq
    %v1047 = vshrl.u32 %v1046, 7
    %v1048 = vadd.s32 %v1047, 8
    %v1049 = vadd.s32 %v1047, 16
    %v1050 = vadd.s32 %v1047, 24
    %v1051 = vadd.s32 %v1047, 32
    %v1052 = vadd.s32 %v1047, 40
    %v1053 = vadd.s32 %v1047, 48
    %v1054 = vadd.s32 %v1047, 56
    %v1055 = vadd.s32 %v1047, 64
    %v1056 = vadd.s32 %v1047, 72
    %v1057 = vadd.s32 %v1047, 80
    %v1058 = vadd.s32 %v1047, 88
    %v1059 = vadd.s32 %v1047, 96
    %v1060 = vadd.s32 %v1047, 104
    %v1061 = vadd.s32 %v1047, 112
    %v1062 = vadd.s32 %v1047, 120
    %v1063 = vlaneseq
    %v1064 = vshrl.u32 %v1063, 7
    %v1065 = vsub.s32 0, %v1064
    %v1066 = vrot.slane %v135, %v1065
    %vm1067 = vcmp.eq.s32.totalorder %v1047, %v1066
    %vm1068 = vcmp.eq.s32.totalorder %v1048, %v1066
    %vm1069 = vcmp.eq.s32.totalorder %v1049, %v1066
    %vm1070 = vcmp.eq.s32.totalorder %v1050, %v1066
    %vm1071 = vcmp.eq.s32.totalorder %v1051, %v1066
    %vm1072 = vcmp.eq.s32.totalorder %v1052, %v1066
    %vm1073 = vcmp.eq.s32.totalorder %v1053, %v1066
    %vm1074 = vcmp.eq.s32.totalorder %v1054, %v1066
    %vm1075 = vcmp.eq.s32.totalorder %v1055, %v1066
    %vm1076 = vcmp.eq.s32.totalorder %v1056, %v1066
    %vm1077 = vcmp.eq.s32.totalorder %v1057, %v1066
    %vm1078 = vcmp.eq.s32.totalorder %v1058, %v1066
    %vm1079 = vcmp.eq.s32.totalorder %v1059, %v1066
    %vm1080 = vcmp.eq.s32.totalorder %v1060, %v1066
    %vm1081 = vcmp.eq.s32.totalorder %v1061, %v1066
    %vm1082 = vcmp.eq.s32.totalorder %v1062, %v1066
    %v1083 = vsel %vm1067, 1.0, 0.0
    %v1084 = vsel %vm1068, 1.0, 0.0
    %v1085 = vsel %vm1069, 1.0, 0.0
    %v1086 = vsel %vm1070, 1.0, 0.0
    %v1087 = vsel %vm1071, 1.0, 0.0
    %v1088 = vsel %vm1072, 1.0, 0.0
    %v1089 = vsel %vm1073, 1.0, 0.0
    %v1090 = vsel %vm1074, 1.0, 0.0
    %v1091 = vsel %vm1075, 1.0, 0.0
    %v1092 = vsel %vm1076, 1.0, 0.0
    %v1093 = vsel %vm1077, 1.0, 0.0
    %v1094 = vsel %vm1078, 1.0, 0.0
    %v1095 = vsel %vm1079, 1.0, 0.0
    %v1096 = vsel %vm1080, 1.0, 0.0
    %v1097 = vsel %vm1081, 1.0, 0.0
    %v1098 = vsel %vm1082, 1.0, 0.0
    %v1099 = vpack.c.bf16 %v1084, %v1083
    %v1100 = vpack.c.bf16 %v1086, %v1085
    %v1101 = vpack.c.bf16 %v1088, %v1087
    %v1102 = vpack.c.bf16 %v1090, %v1089
    %v1103 = vpack.c.bf16 %v1092, %v1091
    %v1104 = vpack.c.bf16 %v1094, %v1093
    %v1105 = vpack.c.bf16 %v1096, %v1095
    %v1106 = vpack.c.bf16 %v1098, %v1097
    %v1107 = vld [vmem:[#allocation8] sm:$0xff]
    %v1108 = vld [vmem:[#allocation8 + $0x8] sm:$0xff]
    %v1109 = vld [vmem:[#allocation8 + $0x10] sm:$0xff]
    %v1110 = vld [vmem:[#allocation8 + $0x18] sm:$0xff]
    %v1111 = vld [vmem:[#allocation8 + $0x20] sm:$0xff]
    %v1112 = vld [vmem:[#allocation8 + $0x28] sm:$0xff]
    %v1113 = vld [vmem:[#allocation8 + $0x30] sm:$0xff]
    %v1114 = vld [vmem:[#allocation8 + $0x38] sm:$0xff]
    %v1115 = vld [vmem:[#allocation8 + $0x40] sm:$0xff]
    %v1116 = vld [vmem:[#allocation8 + $0x48] sm:$0xff]
    %v1117 = vld [vmem:[#allocation8 + $0x50] sm:$0xff]
    %v1118 = vld [vmem:[#allocation8 + $0x58] sm:$0xff]
    %v1119 = vld [vmem:[#allocation8 + $0x60] sm:$0xff]
    %v1120 = vld [vmem:[#allocation8 + $0x68] sm:$0xff]
    %v1121 = vld [vmem:[#allocation8 + $0x70] sm:$0xff]
    %v1122 = vld [vmem:[#allocation8 + $0x78] sm:$0xff]
    %v1123 = vpack.c.bf16 %v987, %v984
    %v1124 = vpack.c.bf16 %v995, %v992
    %v1125 = vpack.c.bf16 %v1003, %v1000
    %v1126 = vpack.c.bf16 %v1011, %v1008
    %v1127 = vpack.c.bf16 %v1019, %v1016
    %v1128 = vpack.c.bf16 %v1027, %v1024
    %v1129 = vpack.c.bf16 %v1035, %v1032
    %v1130 = vpack.c.bf16 %v1043, %v1040
    %1131 = vmatprep.subr.bf16.mxu0 0
    %1132 = vmatpush1.bf16.msra.mxu0 %v1130
    %1133 = vmatprep.subr.bf16.mxu0 0
    %1134 = vmatpush1.bf16.msra.mxu0 %v1129
    %1135 = vmatprep.subr.bf16.mxu0 0
    %1136 = vmatpush1.bf16.msra.mxu0 %v1128
    %1137 = vmatprep.subr.bf16.mxu0 0
    %1138 = vmatpush1.bf16.msra.mxu0 %v1127
    %1139 = vmatprep.subr.bf16.mxu0 0
    %1140 = vmatpush1.bf16.msra.mxu0 %v1126
    %1141 = vmatprep.subr.bf16.mxu0 0
    %1142 = vmatpush1.bf16.msra.mxu0 %v1125
    %1143 = vmatprep.subr.bf16.mxu0 0
    %1144 = vmatpush1.bf16.msra.mxu0 %v1124
    %1145 = vmatprep.subr.bf16.mxu0 0
    %1146 = vmatpush1.bf16.msra.mxu0 %v1123
    %1147 = vmatprep.subr.bf16.mxu0 0
    %1148 = vmatpush2.bf16.msra.mxu0 0
    %1149 = vmatprep.subr.bf16.mxu0 0
    %1150 = vmatpush2.bf16.msra.mxu0 0
    %1151 = vmatprep.subr.bf16.mxu0 0
    %1152 = vmatpush2.bf16.msra.mxu0 0
    %1153 = vmatprep.subr.bf16.mxu0 0
    %1154 = vmatpush2.bf16.msra.mxu0 0
    %1155 = vmatprep.subr.bf16.mxu0 0
    %1156 = vmatpush2.bf16.msra.mxu0 0
    %1157 = vmatprep.subr.bf16.mxu0 0
    %1158 = vmatpush2.bf16.msra.mxu0 0
    %1159 = vmatprep.subr.bf16.mxu0 0
    %1160 = vmatpush2.bf16.msra.mxu0 0
    %1161 = vmatprep.subr.bf16.mxu0 0
    %1162 = vmatpush2.bf16.msra.mxu0 0
    %1163 = vmatprep.mubr.bf16.mxu0 0
    %1164 = vmatmul.mubr.bf16.gmra.mxu0 %v1099
    %v1165 = vpop.f32.mrf.mxu0
    %v1166 = vadd.f32 0.0, %v1165
    %v1167 = vpop.f32.mrf.mxu0
    %v1168 = vpop.f32.mrf.mxu0
    %v1169 = vadd.f32 0.0, %v1168
    %v1170 = vpop.f32.mrf.mxu0
    %1171 = vmatprep.mubr.bf16.mxu0 0
    %1172 = vmatmul.mubr.bf16.gmra.mxu0 %v1100
    %v1173 = vpop.f32.mrf.mxu0
    %v1174 = vadd.f32 0.0, %v1173
    %v1175 = vpop.f32.mrf.mxu0
    %v1176 = vpop.f32.mrf.mxu0
    %v1177 = vadd.f32 0.0, %v1176
    %v1178 = vpop.f32.mrf.mxu0
    %1179 = vmatprep.mubr.bf16.mxu0 0
    %1180 = vmatmul.mubr.bf16.gmra.mxu0 %v1101
    %v1181 = vpop.f32.mrf.mxu0
    %v1182 = vadd.f32 0.0, %v1181
    %v1183 = vpop.f32.mrf.mxu0
    %v1184 = vpop.f32.mrf.mxu0
    %v1185 = vadd.f32 0.0, %v1184
    %v1186 = vpop.f32.mrf.mxu0
    %1187 = vmatprep.mubr.bf16.mxu0 0
    %1188 = vmatmul.mubr.bf16.gmra.mxu0 %v1102
    %v1189 = vpop.f32.mrf.mxu0
    %v1190 = vadd.f32 0.0, %v1189
    %v1191 = vpop.f32.mrf.mxu0
    %v1192 = vpop.f32.mrf.mxu0
    %v1193 = vadd.f32 0.0, %v1192
    %v1194 = vpop.f32.mrf.mxu0
    %1195 = vmatprep.mubr.bf16.mxu0 0
    %1196 = vmatmul.mubr.bf16.gmra.mxu0 %v1103
    %v1197 = vpop.f32.mrf.mxu0
    %v1198 = vadd.f32 0.0, %v1197
    %v1199 = vpop.f32.mrf.mxu0
    %v1200 = vpop.f32.mrf.mxu0
    %v1201 = vadd.f32 0.0, %v1200
    %v1202 = vpop.f32.mrf.mxu0
    %1203 = vmatprep.mubr.bf16.mxu0 0
    %1204 = vmatmul.mubr.bf16.gmra.mxu0 %v1104
    %v1205 = vpop.f32.mrf.mxu0
    %v1206 = vadd.f32 0.0, %v1205
    %v1207 = vpop.f32.mrf.mxu0
    %v1208 = vpop.f32.mrf.mxu0
    %v1209 = vadd.f32 0.0, %v1208
    %v1210 = vpop.f32.mrf.mxu0
    %1211 = vmatprep.mubr.bf16.mxu0 0
    %1212 = vmatmul.mubr.bf16.gmra.mxu0 %v1105
    %v1213 = vpop.f32.mrf.mxu0
    %v1214 = vadd.f32 0.0, %v1213
    %v1215 = vpop.f32.mrf.mxu0
    %v1216 = vpop.f32.mrf.mxu0
    %v1217 = vadd.f32 0.0, %v1216
    %v1218 = vpop.f32.mrf.mxu0
    %1219 = vmatprep.mubr.bf16.mxu0 0
    %1220 = vmatmul.mubr.bf16.gmra.mxu0 %v1106
    %v1221 = vpop.f32.mrf.mxu0
    %v1222 = vadd.f32 0.0, %v1221
    %v1223 = vpop.f32.mrf.mxu0
    %v1224 = vpop.f32.mrf.mxu0
    %v1225 = vadd.f32 0.0, %v1224
    %v1226 = vpop.f32.mrf.mxu0
    %1227 = vdwg.mxu0
    %v1228 = vadd.f32 %v1107, %v1166
    %v1229 = vadd.f32 %v1108, %v1169
    %v1230 = vadd.f32 %v1109, %v1174
    %v1231 = vadd.f32 %v1110, %v1177
    %v1232 = vadd.f32 %v1111, %v1182
    %v1233 = vadd.f32 %v1112, %v1185
    %v1234 = vadd.f32 %v1113, %v1190
    %v1235 = vadd.f32 %v1114, %v1193
    %v1236 = vadd.f32 %v1115, %v1198
    %v1237 = vadd.f32 %v1116, %v1201
    %v1238 = vadd.f32 %v1117, %v1206
    %v1239 = vadd.f32 %v1118, %v1209
    %v1240 = vadd.f32 %v1119, %v1214
    %v1241 = vadd.f32 %v1120, %v1217
    %v1242 = vadd.f32 %v1121, %v1222
    %v1243 = vadd.f32 %v1122, %v1225
    %1244 = vst [vmem:[#allocation8] sm:$0xff] %v1228
    %1245 = vst [vmem:[#allocation8 + $0x8] sm:$0xff] %v1229
    %1246 = vst [vmem:[#allocation8 + $0x10] sm:$0xff] %v1230
    %1247 = vst [vmem:[#allocation8 + $0x18] sm:$0xff] %v1231
    %1248 = vst [vmem:[#allocation8 + $0x20] sm:$0xff] %v1232
    %1249 = vst [vmem:[#allocation8 + $0x28] sm:$0xff] %v1233
    %1250 = vst [vmem:[#allocation8 + $0x30] sm:$0xff] %v1234
    %1251 = vst [vmem:[#allocation8 + $0x38] sm:$0xff] %v1235
    %1252 = vst [vmem:[#allocation8 + $0x40] sm:$0xff] %v1236
    %1253 = vst [vmem:[#allocation8 + $0x48] sm:$0xff] %v1237
    %1254 = vst [vmem:[#allocation8 + $0x50] sm:$0xff] %v1238
    %1255 = vst [vmem:[#allocation8 + $0x58] sm:$0xff] %v1239
    %1256 = vst [vmem:[#allocation8 + $0x60] sm:$0xff] %v1240
    %1257 = vst [vmem:[#allocation8 + $0x68] sm:$0xff] %v1241
    %1258 = vst [vmem:[#allocation8 + $0x70] sm:$0xff] %v1242
    %1259 = vst [vmem:[#allocation8 + $0x78] sm:$0xff] %v1243
    // Predicated region
    $region46: #{tpu_custom_call.1} parent=1 // pred_check
      %p1260 = pneg %p67
    $region47: #{tpu_custom_call.1} parent=1 // pred_check_branch
      %1262 = sbr.rel (%p1260) target = $region49
    $region48: #{tpu_custom_call.1} parent=1 // pred_region
      %v1263 = vld [vmem:[#allocation8] sm:$0xff]
      %v1264 = vld [vmem:[#allocation8 + $0x8] sm:$0xff]
      %v1265 = vld [vmem:[#allocation8 + $0x10] sm:$0xff]
      %v1266 = vld [vmem:[#allocation8 + $0x18] sm:$0xff]
      %v1267 = vld [vmem:[#allocation8 + $0x20] sm:$0xff]
      %v1268 = vld [vmem:[#allocation8 + $0x28] sm:$0xff]
      %v1269 = vld [vmem:[#allocation8 + $0x30] sm:$0xff]
      %v1270 = vld [vmem:[#allocation8 + $0x38] sm:$0xff]
      %v1271 = vld [vmem:[#allocation8 + $0x40] sm:$0xff]
      %v1272 = vld [vmem:[#allocation8 + $0x48] sm:$0xff]
      %v1273 = vld [vmem:[#allocation8 + $0x50] sm:$0xff]
      %v1274 = vld [vmem:[#allocation8 + $0x58] sm:$0xff]
      %v1275 = vld [vmem:[#allocation8 + $0x60] sm:$0xff]
      %v1276 = vld [vmem:[#allocation8 + $0x68] sm:$0xff]
      %v1277 = vld [vmem:[#allocation8 + $0x70] sm:$0xff]
      %v1278 = vld [vmem:[#allocation8 + $0x78] sm:$0xff]
      %v1279 = vmax.f32 %v1263, 1.0
      %v1280 = vmax.f32 %v1264, 1.0
      %v1281 = vmax.f32 %v1265, 1.0
      %v1282 = vmax.f32 %v1266, 1.0
      %v1283 = vmax.f32 %v1267, 1.0
      %v1284 = vmax.f32 %v1268, 1.0
      %v1285 = vmax.f32 %v1269, 1.0
      %v1286 = vmax.f32 %v1270, 1.0
      %v1287 = vmax.f32 %v1271, 1.0
      %v1288 = vmax.f32 %v1272, 1.0
      %v1289 = vmax.f32 %v1273, 1.0
      %v1290 = vmax.f32 %v1274, 1.0
      %v1291 = vmax.f32 %v1275, 1.0
      %v1292 = vmax.f32 %v1276, 1.0
      %v1293 = vmax.f32 %v1277, 1.0
      %v1294 = vmax.f32 %v1278, 1.0
      %v1295 = vrcp.pop %v1279
      %v1296 = vrcp.pop %v1280
      %v1297 = vrcp.pop %v1281
      %v1298 = vrcp.pop %v1282
      %v1299 = vrcp.pop %v1283
      %v1300 = vrcp.pop %v1284
      %v1301 = vrcp.pop %v1285
      %v1302 = vrcp.pop %v1286
      %v1303 = vrcp.pop %v1287
      %v1304 = vrcp.pop %v1288
      %v1305 = vrcp.pop %v1289
      %v1306 = vrcp.pop %v1290
      %v1307 = vrcp.pop %v1291
      %v1308 = vrcp.pop %v1292
      %v1309 = vrcp.pop %v1293
      %v1310 = vrcp.pop %v1294
      %1312 = vset.pattern.permute.xlu0 32
      %1313 = vperm.xlu0 %1312, %v1295
      %v1314 = vpop.permute.xlu0 %1313
      %1317 = vset.pattern.permute.xlu0 32
      %1318 = vperm.xlu0 %1317, %v1296
      %v1319 = vpop.permute.xlu0 %1318
      %1322 = vset.pattern.permute.xlu0 32
      %1323 = vperm.xlu0 %1322, %v1297
      %v1324 = vpop.permute.xlu0 %1323
      %1327 = vset.pattern.permute.xlu0 32
      %1328 = vperm.xlu0 %1327, %v1298
      %v1329 = vpop.permute.xlu0 %1328
      %1332 = vset.pattern.permute.xlu0 32
      %1333 = vperm.xlu0 %1332, %v1299
      %v1334 = vpop.permute.xlu0 %1333
      %1337 = vset.pattern.permute.xlu0 32
      %1338 = vperm.xlu0 %1337, %v1300
      %v1339 = vpop.permute.xlu0 %1338
      %1342 = vset.pattern.permute.xlu0 32
      %1343 = vperm.xlu0 %1342, %v1301
      %v1344 = vpop.permute.xlu0 %1343
      %1347 = vset.pattern.permute.xlu0 32
      %1348 = vperm.xlu0 %1347, %v1302
      %v1349 = vpop.permute.xlu0 %1348
      %1352 = vset.pattern.permute.xlu0 32
      %1353 = vperm.xlu0 %1352, %v1303
      %v1354 = vpop.permute.xlu0 %1353
      %1357 = vset.pattern.permute.xlu0 32
      %1358 = vperm.xlu0 %1357, %v1304
      %v1359 = vpop.permute.xlu0 %1358
      %1362 = vset.pattern.permute.xlu0 32
      %1363 = vperm.xlu0 %1362, %v1305
      %v1364 = vpop.permute.xlu0 %1363
      %1367 = vset.pattern.permute.xlu0 32
      %1368 = vperm.xlu0 %1367, %v1306
      %v1369 = vpop.permute.xlu0 %1368
      %1372 = vset.pattern.permute.xlu0 32
      %1373 = vperm.xlu0 %1372, %v1307
      %v1374 = vpop.permute.xlu0 %1373
      %1377 = vset.pattern.permute.xlu0 32
      %1378 = vperm.xlu0 %1377, %v1308
      %v1379 = vpop.permute.xlu0 %1378
      %1382 = vset.pattern.permute.xlu0 32
      %1383 = vperm.xlu0 %1382, %v1309
      %v1384 = vpop.permute.xlu0 %1383
      %1387 = vset.pattern.permute.xlu0 32
      %1388 = vperm.xlu0 %1387, %v1310
      %v1389 = vpop.permute.xlu0 %1388
      %v1391 = vmul.f32 %v1263, %v1314
      %v1392 = vmul.f32 %v1264, %v1319
      %v1393 = vmul.f32 %v1265, %v1324
      %v1394 = vmul.f32 %v1266, %v1329
      %v1395 = vmul.f32 %v1267, %v1334
      %v1396 = vmul.f32 %v1268, %v1339
      %v1397 = vmul.f32 %v1269, %v1344
      %v1398 = vmul.f32 %v1270, %v1349
      %v1399 = vmul.f32 %v1271, %v1354
      %v1400 = vmul.f32 %v1272, %v1359
      %v1401 = vmul.f32 %v1273, %v1364
      %v1402 = vmul.f32 %v1274, %v1369
      %v1403 = vmul.f32 %v1275, %v1374
      %v1404 = vmul.f32 %v1276, %v1379
      %v1405 = vmul.f32 %v1277, %v1384
      %v1406 = vmul.f32 %v1278, %v1389
      %v1407 = vpack.c.bf16 %v1392, %v1391
      %v1408 = vpack.c.bf16 %v1394, %v1393
      %v1409 = vpack.c.bf16 %v1396, %v1395
      %v1410 = vpack.c.bf16 %v1398, %v1397
      %v1411 = vpack.c.bf16 %v1400, %v1399
      %v1412 = vpack.c.bf16 %v1402, %v1401
      %v1413 = vpack.c.bf16 %v1404, %v1403
      %v1414 = vpack.c.bf16 %v1406, %v1405
      %s1415 = scalar_lea.vmem [#allocation5], 128
      %v1416 = vld [vmem:[%s1415] sm:$0xf]
      %v1417 = vld [vmem:[%s1415 + $0x4] sm:$0xf]
      %v1418 = vld [vmem:[%s1415 + $0x8] sm:$0xf]
      %v1419 = vld [vmem:[%s1415 + $0xc] sm:$0xf]
      %v1420 = vld [vmem:[%s1415 + $0x10] sm:$0xf]
      %v1421 = vld [vmem:[%s1415 + $0x14] sm:$0xf]
      %v1422 = vld [vmem:[%s1415 + $0x18] sm:$0xf]
      %v1423 = vld [vmem:[%s1415 + $0x1c] sm:$0xf]
      %v1424 = vld [vmem:[%s1415 + $0x20] sm:$0xf]
      %v1425 = vld [vmem:[%s1415 + $0x24] sm:$0xf]
      %v1426 = vld [vmem:[%s1415 + $0x28] sm:$0xf]
      %v1427 = vld [vmem:[%s1415 + $0x2c] sm:$0xf]
      %v1428 = vld [vmem:[%s1415 + $0x30] sm:$0xf]
      %v1429 = vld [vmem:[%s1415 + $0x34] sm:$0xf]
      %v1430 = vld [vmem:[%s1415 + $0x38] sm:$0xf]
      %v1431 = vld [vmem:[%s1415 + $0x3c] sm:$0xf]
      %v1432 = vld [vmem:[%s1415 + $0x40] sm:$0xf]
      %v1433 = vld [vmem:[%s1415 + $0x44] sm:$0xf]
      %v1434 = vld [vmem:[%s1415 + $0x48] sm:$0xf]
      %v1435 = vld [vmem:[%s1415 + $0x4c] sm:$0xf]
      %v1436 = vld [vmem:[%s1415 + $0x50] sm:$0xf]
      %v1437 = vld [vmem:[%s1415 + $0x54] sm:$0xf]
      %v1438 = vld [vmem:[%s1415 + $0x58] sm:$0xf]
      %v1439 = vld [vmem:[%s1415 + $0x5c] sm:$0xf]
      %v1440 = vld [vmem:[%s1415 + $0x60] sm:$0xf]
      %v1441 = vld [vmem:[%s1415 + $0x64] sm:$0xf]
      %v1442 = vld [vmem:[%s1415 + $0x68] sm:$0xf]
      %v1443 = vld [vmem:[%s1415 + $0x6c] sm:$0xf]
      %v1444 = vld [vmem:[%s1415 + $0x70] sm:$0xf]
      %v1445 = vld [vmem:[%s1415 + $0x74] sm:$0xf]
      %v1446 = vld [vmem:[%s1415 + $0x78] sm:$0xf]
      %v1447 = vld [vmem:[%s1415 + $0x7c] sm:$0xf]
      %s1448 = scalar_lea.vmem %s6, 3
      %v1449 = vld [vmem:[%s1448] sm:$0x1]
      %v1451 = vlaneseq
      %v1452 = vshrl.u32 %v1451, 7
      %v1453 = vsub.s32 0, %v1452
      %v1454 = vrot.slane %v1449, %v1453
      %v1488 = vunpack.c.l.b16 %v1416
      %v1489 = vunpack.c.l.b16 %v1417
      %v1490 = vunpack.c.l.b16 %v1418
      %v1491 = vunpack.c.l.b16 %v1419
      %v1492 = vunpack.c.l.b16 %v1420
      %v1493 = vunpack.c.l.b16 %v1421
      %v1494 = vunpack.c.l.b16 %v1422
      %v1495 = vunpack.c.l.b16 %v1423
      %v1496 = vunpack.c.l.b16 %v1424
      %v1497 = vunpack.c.l.b16 %v1425
      %v1498 = vunpack.c.l.b16 %v1426
      %v1499 = vunpack.c.l.b16 %v1427
      %v1500 = vunpack.c.l.b16 %v1428
      %v1501 = vunpack.c.l.b16 %v1429
      %v1502 = vunpack.c.l.b16 %v1430
      %v1503 = vunpack.c.l.b16 %v1431
      %v1504 = vunpack.c.l.b16 %v1432
      %v1505 = vunpack.c.l.b16 %v1433
      %v1506 = vunpack.c.l.b16 %v1434
      %v1507 = vunpack.c.l.b16 %v1435
      %v1508 = vunpack.c.l.b16 %v1436
      %v1509 = vunpack.c.l.b16 %v1437
      %v1510 = vunpack.c.l.b16 %v1438
      %v1511 = vunpack.c.l.b16 %v1439
      %v1512 = vunpack.c.l.b16 %v1440
      %v1513 = vunpack.c.l.b16 %v1441
      %v1514 = vunpack.c.l.b16 %v1442
      %v1515 = vunpack.c.l.b16 %v1443
      %v1516 = vunpack.c.l.b16 %v1444
      %v1517 = vunpack.c.l.b16 %v1445
      %v1518 = vunpack.c.l.b16 %v1446
      %v1519 = vunpack.c.l.b16 %v1447
      %v1520 = vpack.c.b16 %v1489, %v1488
      %v1521 = vpack.c.b16 %v1491, %v1490
      %v1522 = vpack.c.b16 %v1493, %v1492
      %v1523 = vpack.c.b16 %v1495, %v1494
      %v1524 = vpack.c.b16 %v1497, %v1496
      %v1525 = vpack.c.b16 %v1499, %v1498
      %v1526 = vpack.c.b16 %v1501, %v1500
      %v1527 = vpack.c.b16 %v1503, %v1502
      %v1528 = vpack.c.b16 %v1505, %v1504
      %v1529 = vpack.c.b16 %v1507, %v1506
      %v1530 = vpack.c.b16 %v1509, %v1508
      %v1531 = vpack.c.b16 %v1511, %v1510
      %v1532 = vpack.c.b16 %v1513, %v1512
      %v1533 = vpack.c.b16 %v1515, %v1514
      %v1534 = vpack.c.b16 %v1517, %v1516
      %v1535 = vpack.c.b16 %v1519, %v1518
      %1552 = vmatprep.subr.bf16.mxu0 0
      %1553 = vmatpush1.bf16.msra.mxu0 %v1527
      %1554 = vmatprep.subr.bf16.mxu0 0
      %1555 = vmatpush1.bf16.msra.mxu0 %v1526
      %1556 = vmatprep.subr.bf16.mxu0 0
      %1557 = vmatpush1.bf16.msra.mxu0 %v1525
      %1558 = vmatprep.subr.bf16.mxu0 0
      %1559 = vmatpush1.bf16.msra.mxu0 %v1524
      %1560 = vmatprep.subr.bf16.mxu0 0
      %1561 = vmatpush1.bf16.msra.mxu0 %v1523
      %1562 = vmatprep.subr.bf16.mxu0 0
      %1563 = vmatpush1.bf16.msra.mxu0 %v1522
      %1564 = vmatprep.subr.bf16.mxu0 0
      %1565 = vmatpush1.bf16.msra.mxu0 %v1521
      %1566 = vmatprep.subr.bf16.mxu0 0
      %1567 = vmatpush1.bf16.msra.mxu0 %v1520
      %1568 = vmatprep.subr.bf16.mxu0 0
      %1569 = vmatpush2.bf16.msra.mxu0 %v1535
      %1570 = vmatprep.subr.bf16.mxu0 0
      %1571 = vmatpush2.bf16.msra.mxu0 %v1534
      %1572 = vmatprep.subr.bf16.mxu0 0
      %1573 = vmatpush2.bf16.msra.mxu0 %v1533
      %1574 = vmatprep.subr.bf16.mxu0 0
      %1575 = vmatpush2.bf16.msra.mxu0 %v1532
      %1576 = vmatprep.subr.bf16.mxu0 0
      %1577 = vmatpush2.bf16.msra.mxu0 %v1531
      %1578 = vmatprep.subr.bf16.mxu0 0
      %1579 = vmatpush2.bf16.msra.mxu0 %v1530
      %1580 = vmatprep.subr.bf16.mxu0 0
      %1581 = vmatpush2.bf16.msra.mxu0 %v1529
      %1582 = vmatprep.subr.bf16.mxu0 0
      %1583 = vmatpush2.bf16.msra.mxu0 %v1528
      %1584 = vmatprep.mubr.bf16.mxu0 %v1407
      %1585 = vmatmul.mubr.bf16.gmra.mxu0 %v258
      %v1586 = vpop.f32.mrf.mxu0
      %v1587 = vadd.f32 %v1454, %v1586
      %v1588 = vpop.f32.mrf.mxu0
      %v1589 = vpop.f32.mrf.mxu0
      %v1590 = vadd.f32 %v1454, %v1589
      %v1591 = vpop.f32.mrf.mxu0
      %1592 = vmatprep.mubr.bf16.mxu0 %v1408
      %1593 = vmatmul.mubr.bf16.gmra.mxu0 %v259
      %v1594 = vpop.f32.mrf.mxu0
      %v1595 = vadd.f32 %v1454, %v1594
      %v1596 = vpop.f32.mrf.mxu0
      %v1597 = vpop.f32.mrf.mxu0
      %v1598 = vadd.f32 %v1454, %v1597
      %v1599 = vpop.f32.mrf.mxu0
      %1600 = vmatprep.mubr.bf16.mxu0 %v1409
      %1601 = vmatmul.mubr.bf16.gmra.mxu0 %v260
      %v1602 = vpop.f32.mrf.mxu0
      %v1603 = vadd.f32 %v1454, %v1602
      %v1604 = vpop.f32.mrf.mxu0
      %v1605 = vpop.f32.mrf.mxu0
      %v1606 = vadd.f32 %v1454, %v1605
      %v1607 = vpop.f32.mrf.mxu0
      %1608 = vmatprep.mubr.bf16.mxu0 %v1410
      %1609 = vmatmul.mubr.bf16.gmra.mxu0 %v261
      %v1610 = vpop.f32.mrf.mxu0
      %v1611 = vadd.f32 %v1454, %v1610
      %v1612 = vpop.f32.mrf.mxu0
      %v1613 = vpop.f32.mrf.mxu0
      %v1614 = vadd.f32 %v1454, %v1613
      %v1615 = vpop.f32.mrf.mxu0
      %1616 = vmatprep.mubr.bf16.mxu0 %v1411
      %1617 = vmatmul.mubr.bf16.gmra.mxu0 %v262
      %v1618 = vpop.f32.mrf.mxu0
      %v1619 = vadd.f32 %v1454, %v1618
      %v1620 = vpop.f32.mrf.mxu0
      %v1621 = vpop.f32.mrf.mxu0
      %v1622 = vadd.f32 %v1454, %v1621
      %v1623 = vpop.f32.mrf.mxu0
      %1624 = vmatprep.mubr.bf16.mxu0 %v1412
      %1625 = vmatmul.mubr.bf16.gmra.mxu0 %v263
      %v1626 = vpop.f32.mrf.mxu0
      %v1627 = vadd.f32 %v1454, %v1626
      %v1628 = vpop.f32.mrf.mxu0
      %v1629 = vpop.f32.mrf.mxu0
      %v1630 = vadd.f32 %v1454, %v1629
      %v1631 = vpop.f32.mrf.mxu0
      %1632 = vmatprep.mubr.bf16.mxu0 %v1413
      %1633 = vmatmul.mubr.bf16.gmra.mxu0 %v264
      %v1634 = vpop.f32.mrf.mxu0
      %v1635 = vadd.f32 %v1454, %v1634
      %v1636 = vpop.f32.mrf.mxu0
      %v1637 = vpop.f32.mrf.mxu0
      %v1638 = vadd.f32 %v1454, %v1637
      %v1639 = vpop.f32.mrf.mxu0
      %1640 = vmatprep.mubr.bf16.mxu0 %v1414
      %1641 = vmatmul.mubr.bf16.gmra.mxu0 %v265
      %v1642 = vpop.f32.mrf.mxu0
      %v1643 = vadd.f32 %v1454, %v1642
      %v1644 = vpop.f32.mrf.mxu0
      %v1645 = vpop.f32.mrf.mxu0
      %v1646 = vadd.f32 %v1454, %v1645
      %v1647 = vpop.f32.mrf.mxu0
      %1648 = vdwg.mxu0
      %v1649 = vmax.f32 %v1587, 0.0
      %v1650 = vmax.f32 %v1590, 0.0
      %v1651 = vmax.f32 %v1595, 0.0
      %v1652 = vmax.f32 %v1598, 0.0
      %v1653 = vmax.f32 %v1603, 0.0
      %v1654 = vmax.f32 %v1606, 0.0
      %v1655 = vmax.f32 %v1611, 0.0
      %v1656 = vmax.f32 %v1614, 0.0
      %v1657 = vmax.f32 %v1619, 0.0
      %v1658 = vmax.f32 %v1622, 0.0
      %v1659 = vmax.f32 %v1627, 0.0
      %v1660 = vmax.f32 %v1630, 0.0
      %v1661 = vmax.f32 %v1635, 0.0
      %v1662 = vmax.f32 %v1638, 0.0
      %v1663 = vmax.f32 %v1643, 0.0
      %v1664 = vmax.f32 %v1646, 0.0
      %v1665 = vpack.c.bf16 %v1650, %v1649
      %v1666 = vpack.c.bf16 %v1652, %v1651
      %v1667 = vpack.c.bf16 %v1654, %v1653
      %v1668 = vpack.c.bf16 %v1656, %v1655
      %v1669 = vpack.c.bf16 %v1658, %v1657
      %v1670 = vpack.c.bf16 %v1660, %v1659
      %v1671 = vpack.c.bf16 %v1662, %v1661
      %v1672 = vpack.c.bf16 %v1664, %v1663
      %s1673 = scalar_lea.vmem [#allocation7], 128
      %v1674 = vld [vmem:[%s1673] sm:$0xf]
      %v1675 = vld [vmem:[%s1673 + $0x4] sm:$0xf]
      %v1676 = vld [vmem:[%s1673 + $0x8] sm:$0xf]
      %v1677 = vld [vmem:[%s1673 + $0xc] sm:$0xf]
      %v1678 = vld [vmem:[%s1673 + $0x10] sm:$0xf]
      %v1679 = vld [vmem:[%s1673 + $0x14] sm:$0xf]
      %v1680 = vld [vmem:[%s1673 + $0x18] sm:$0xf]
      %v1681 = vld [vmem:[%s1673 + $0x1c] sm:$0xf]
      %v1682 = vld [vmem:[%s1673 + $0x20] sm:$0xf]
      %v1683 = vld [vmem:[%s1673 + $0x24] sm:$0xf]
      %v1684 = vld [vmem:[%s1673 + $0x28] sm:$0xf]
      %v1685 = vld [vmem:[%s1673 + $0x2c] sm:$0xf]
      %v1686 = vld [vmem:[%s1673 + $0x30] sm:$0xf]
      %v1687 = vld [vmem:[%s1673 + $0x34] sm:$0xf]
      %v1688 = vld [vmem:[%s1673 + $0x38] sm:$0xf]
      %v1689 = vld [vmem:[%s1673 + $0x3c] sm:$0xf]
      %s1690 = scalar_lea.vmem %s6, 4
      %v1691 = vld [vmem:[%s1690] sm:$0x1]
      %v1693 = vlaneseq
      %v1694 = vshrl.u32 %v1693, 7
      %v1695 = vsub.s32 0, %v1694
      %v1696 = vrot.slane %v1691, %v1695
      %v1714 = vunpack.c.l.b16 %v1674
      %v1715 = vunpack.c.l.b16 %v1675
      %v1716 = vunpack.c.l.b16 %v1676
      %v1717 = vunpack.c.l.b16 %v1677
      %v1718 = vunpack.c.l.b16 %v1678
      %v1719 = vunpack.c.l.b16 %v1679
      %v1720 = vunpack.c.l.b16 %v1680
      %v1721 = vunpack.c.l.b16 %v1681
      %v1722 = vunpack.c.l.b16 %v1682
      %v1723 = vunpack.c.l.b16 %v1683
      %v1724 = vunpack.c.l.b16 %v1684
      %v1725 = vunpack.c.l.b16 %v1685
      %v1726 = vunpack.c.l.b16 %v1686
      %v1727 = vunpack.c.l.b16 %v1687
      %v1728 = vunpack.c.l.b16 %v1688
      %v1729 = vunpack.c.l.b16 %v1689
      %v1730 = vpack.c.b16 %v1715, %v1714
      %v1731 = vpack.c.b16 %v1717, %v1716
      %v1732 = vpack.c.b16 %v1719, %v1718
      %v1733 = vpack.c.b16 %v1721, %v1720
      %v1734 = vpack.c.b16 %v1723, %v1722
      %v1735 = vpack.c.b16 %v1725, %v1724
      %v1736 = vpack.c.b16 %v1727, %v1726
      %v1737 = vpack.c.b16 %v1729, %v1728
      %1746 = vmatprep.subr.bf16.mxu0 0
      %1747 = vmatpush1.bf16.msra.mxu0 %v1737
      %1748 = vmatprep.subr.bf16.mxu0 0
      %1749 = vmatpush1.bf16.msra.mxu0 %v1736
      %1750 = vmatprep.subr.bf16.mxu0 0
      %1751 = vmatpush1.bf16.msra.mxu0 %v1735
      %1752 = vmatprep.subr.bf16.mxu0 0
      %1753 = vmatpush1.bf16.msra.mxu0 %v1734
      %1754 = vmatprep.subr.bf16.mxu0 0
      %1755 = vmatpush1.bf16.msra.mxu0 %v1733
      %1756 = vmatprep.subr.bf16.mxu0 0
      %1757 = vmatpush1.bf16.msra.mxu0 %v1732
      %1758 = vmatprep.subr.bf16.mxu0 0
      %1759 = vmatpush1.bf16.msra.mxu0 %v1731
      %1760 = vmatprep.subr.bf16.mxu0 0
      %1761 = vmatpush1.bf16.msra.mxu0 %v1730
      %1762 = vmatprep.subr.bf16.mxu0 0
      %1763 = vmatpush2.bf16.msra.mxu0 0
      %1764 = vmatprep.subr.bf16.mxu0 0
      %1765 = vmatpush2.bf16.msra.mxu0 0
      %1766 = vmatprep.subr.bf16.mxu0 0
      %1767 = vmatpush2.bf16.msra.mxu0 0
      %1768 = vmatprep.subr.bf16.mxu0 0
      %1769 = vmatpush2.bf16.msra.mxu0 0
      %1770 = vmatprep.subr.bf16.mxu0 0
      %1771 = vmatpush2.bf16.msra.mxu0 0
      %1772 = vmatprep.subr.bf16.mxu0 0
      %1773 = vmatpush2.bf16.msra.mxu0 0
      %1774 = vmatprep.subr.bf16.mxu0 0
      %1775 = vmatpush2.bf16.msra.mxu0 0
      %1776 = vmatprep.subr.bf16.mxu0 0
      %1777 = vmatpush2.bf16.msra.mxu0 0
      %1778 = vmatprep.mubr.bf16.mxu0 0
      %1779 = vmatmul.mubr.bf16.gmra.mxu0 %v1665
      %v1780 = vpop.f32.mrf.mxu0
      %v1781 = vadd.f32 %v1696, %v1780
      %v1782 = vpop.f32.mrf.mxu0
      %v1783 = vpop.f32.mrf.mxu0
      %v1784 = vadd.f32 %v1696, %v1783
      %v1785 = vpop.f32.mrf.mxu0
      %1786 = vmatprep.mubr.bf16.mxu0 0
      %1787 = vmatmul.mubr.bf16.gmra.mxu0 %v1666
      %v1788 = vpop.f32.mrf.mxu0
      %v1789 = vadd.f32 %v1696, %v1788
      %v1790 = vpop.f32.mrf.mxu0
      %v1791 = vpop.f32.mrf.mxu0
      %v1792 = vadd.f32 %v1696, %v1791
      %v1793 = vpop.f32.mrf.mxu0
      %1794 = vmatprep.mubr.bf16.mxu0 0
      %1795 = vmatmul.mubr.bf16.gmra.mxu0 %v1667
      %v1796 = vpop.f32.mrf.mxu0
      %v1797 = vadd.f32 %v1696, %v1796
      %v1798 = vpop.f32.mrf.mxu0
      %v1799 = vpop.f32.mrf.mxu0
      %v1800 = vadd.f32 %v1696, %v1799
      %v1801 = vpop.f32.mrf.mxu0
      %1802 = vmatprep.mubr.bf16.mxu0 0
      %1803 = vmatmul.mubr.bf16.gmra.mxu0 %v1668
      %v1804 = vpop.f32.mrf.mxu0
      %v1805 = vadd.f32 %v1696, %v1804
      %v1806 = vpop.f32.mrf.mxu0
      %v1807 = vpop.f32.mrf.mxu0
      %v1808 = vadd.f32 %v1696, %v1807
      %v1809 = vpop.f32.mrf.mxu0
      %1810 = vmatprep.mubr.bf16.mxu0 0
      %1811 = vmatmul.mubr.bf16.gmra.mxu0 %v1669
      %v1812 = vpop.f32.mrf.mxu0
      %v1813 = vadd.f32 %v1696, %v1812
      %v1814 = vpop.f32.mrf.mxu0
      %v1815 = vpop.f32.mrf.mxu0
      %v1816 = vadd.f32 %v1696, %v1815
      %v1817 = vpop.f32.mrf.mxu0
      %1818 = vmatprep.mubr.bf16.mxu0 0
      %1819 = vmatmul.mubr.bf16.gmra.mxu0 %v1670
      %v1820 = vpop.f32.mrf.mxu0
      %v1821 = vadd.f32 %v1696, %v1820
      %v1822 = vpop.f32.mrf.mxu0
      %v1823 = vpop.f32.mrf.mxu0
      %v1824 = vadd.f32 %v1696, %v1823
      %v1825 = vpop.f32.mrf.mxu0
      %1826 = vmatprep.mubr.bf16.mxu0 0
      %1827 = vmatmul.mubr.bf16.gmra.mxu0 %v1671
      %v1828 = vpop.f32.mrf.mxu0
      %v1829 = vadd.f32 %v1696, %v1828
      %v1830 = vpop.f32.mrf.mxu0
      %v1831 = vpop.f32.mrf.mxu0
      %v1832 = vadd.f32 %v1696, %v1831
      %v1833 = vpop.f32.mrf.mxu0
      %1834 = vmatprep.mubr.bf16.mxu0 0
      %1835 = vmatmul.mubr.bf16.gmra.mxu0 %v1672
      %v1836 = vpop.f32.mrf.mxu0
      %v1837 = vadd.f32 %v1696, %v1836
      %v1838 = vpop.f32.mrf.mxu0
      %v1839 = vpop.f32.mrf.mxu0
      %v1840 = vadd.f32 %v1696, %v1839
      %v1841 = vpop.f32.mrf.mxu0
      %1842 = vdwg.mxu0
      %v1843 = vmax.f32 %v1781, 0.0
      %v1844 = vmax.f32 %v1784, 0.0
      %v1845 = vmax.f32 %v1789, 0.0
      %v1846 = vmax.f32 %v1792, 0.0
      %v1847 = vmax.f32 %v1797, 0.0
      %v1848 = vmax.f32 %v1800, 0.0
      %v1849 = vmax.f32 %v1805, 0.0
      %v1850 = vmax.f32 %v1808, 0.0
      %v1851 = vmax.f32 %v1813, 0.0
      %v1852 = vmax.f32 %v1816, 0.0
      %v1853 = vmax.f32 %v1821, 0.0
      %v1854 = vmax.f32 %v1824, 0.0
      %v1855 = vmax.f32 %v1829, 0.0
      %v1856 = vmax.f32 %v1832, 0.0
      %v1857 = vmax.f32 %v1837, 0.0
      %v1858 = vmax.f32 %v1840, 0.0
      %v1859 = vpack.c.bf16 %v1844, %v1843
      %v1860 = vpack.c.bf16 %v1846, %v1845
      %v1861 = vpack.c.bf16 %v1848, %v1847
      %v1862 = vpack.c.bf16 %v1850, %v1849
      %v1863 = vpack.c.bf16 %v1852, %v1851
      %v1864 = vpack.c.bf16 %v1854, %v1853
      %v1865 = vpack.c.bf16 %v1856, %v1855
      %v1866 = vpack.c.bf16 %v1858, %v1857
      %s1867 = scalar_lea.vmem [#allocation7], 192
      %v1868 = vld [vmem:[%s1867] sm:$0xf]
      %v1869 = vld [vmem:[%s1867 + $0x4] sm:$0xf]
      %v1870 = vld [vmem:[%s1867 + $0x8] sm:$0xf]
      %v1871 = vld [vmem:[%s1867 + $0xc] sm:$0xf]
      %v1872 = vld [vmem:[%s1867 + $0x10] sm:$0xf]
      %v1873 = vld [vmem:[%s1867 + $0x14] sm:$0xf]
      %v1874 = vld [vmem:[%s1867 + $0x18] sm:$0xf]
      %v1875 = vld [vmem:[%s1867 + $0x1c] sm:$0xf]
      %v1876 = vld [vmem:[%s1867 + $0x20] sm:$0xf]
      %v1877 = vld [vmem:[%s1867 + $0x24] sm:$0xf]
      %v1878 = vld [vmem:[%s1867 + $0x28] sm:$0xf]
      %v1879 = vld [vmem:[%s1867 + $0x2c] sm:$0xf]
      %v1880 = vld [vmem:[%s1867 + $0x30] sm:$0xf]
      %v1881 = vld [vmem:[%s1867 + $0x34] sm:$0xf]
      %v1882 = vld [vmem:[%s1867 + $0x38] sm:$0xf]
      %v1883 = vld [vmem:[%s1867 + $0x3c] sm:$0xf]
      %s1884 = scalar_lea.vmem %s6, 5
      %v1885 = vld [vmem:[%s1884] sm:$0x1]
      %v1887 = vlaneseq
      %v1888 = vshrl.u32 %v1887, 7
      %v1889 = vsub.s32 0, %v1888
      %v1890 = vrot.slane %v1885, %v1889
      %v1908 = vunpack.c.l.b16 %v1868
      %v1909 = vunpack.c.l.b16 %v1869
      %v1910 = vunpack.c.l.b16 %v1870
      %v1911 = vunpack.c.l.b16 %v1871
      %v1912 = vunpack.c.l.b16 %v1872
      %v1913 = vunpack.c.l.b16 %v1873
      %v1914 = vunpack.c.l.b16 %v1874
      %v1915 = vunpack.c.l.b16 %v1875
      %v1916 = vunpack.c.l.b16 %v1876
      %v1917 = vunpack.c.l.b16 %v1877
      %v1918 = vunpack.c.l.b16 %v1878
      %v1919 = vunpack.c.l.b16 %v1879
      %v1920 = vunpack.c.l.b16 %v1880
      %v1921 = vunpack.c.l.b16 %v1881
      %v1922 = vunpack.c.l.b16 %v1882
      %v1923 = vunpack.c.l.b16 %v1883
      %v1924 = vpack.c.b16 %v1909, %v1908
      %v1925 = vpack.c.b16 %v1911, %v1910
      %v1926 = vpack.c.b16 %v1913, %v1912
      %v1927 = vpack.c.b16 %v1915, %v1914
      %v1928 = vpack.c.b16 %v1917, %v1916
      %v1929 = vpack.c.b16 %v1919, %v1918
      %v1930 = vpack.c.b16 %v1921, %v1920
      %v1931 = vpack.c.b16 %v1923, %v1922
      %1940 = vmatprep.subr.bf16.mxu0 0
      %1941 = vmatpush1.bf16.msra.mxu0 %v1931
      %1942 = vmatprep.subr.bf16.mxu0 0
      %1943 = vmatpush1.bf16.msra.mxu0 %v1930
      %1944 = vmatprep.subr.bf16.mxu0 0
      %1945 = vmatpush1.bf16.msra.mxu0 %v1929
      %1946 = vmatprep.subr.bf16.mxu0 0
      %1947 = vmatpush1.bf16.msra.mxu0 %v1928
      %1948 = vmatprep.subr.bf16.mxu0 0
      %1949 = vmatpush1.bf16.msra.mxu0 %v1927
      %1950 = vmatprep.subr.bf16.mxu0 0
      %1951 = vmatpush1.bf16.msra.mxu0 %v1926
      %1952 = vmatprep.subr.bf16.mxu0 0
      %1953 = vmatpush1.bf16.msra.mxu0 %v1925
      %1954 = vmatprep.subr.bf16.mxu0 0
      %1955 = vmatpush1.bf16.msra.mxu0 %v1924
      %1956 = vmatprep.subr.bf16.mxu0 0
      %1957 = vmatpush2.bf16.msra.mxu0 0
      %1958 = vmatprep.subr.bf16.mxu0 0
      %1959 = vmatpush2.bf16.msra.mxu0 0
      %1960 = vmatprep.subr.bf16.mxu0 0
      %1961 = vmatpush2.bf16.msra.mxu0 0
      %1962 = vmatprep.subr.bf16.mxu0 0
      %1963 = vmatpush2.bf16.msra.mxu0 0
      %1964 = vmatprep.subr.bf16.mxu0 0
      %1965 = vmatpush2.bf16.msra.mxu0 0
      %1966 = vmatprep.subr.bf16.mxu0 0
      %1967 = vmatpush2.bf16.msra.mxu0 0
      %1968 = vmatprep.subr.bf16.mxu0 0
      %1969 = vmatpush2.bf16.msra.mxu0 0
      %1970 = vmatprep.subr.bf16.mxu0 0
      %1971 = vmatpush2.bf16.msra.mxu0 0
      %1972 = vmatprep.mubr.bf16.mxu0 0
      %1973 = vmatmul.mubr.bf16.gmra.mxu0 %v1859
      %v1974 = vpop.f32.mrf.mxu0
      %v1975 = vadd.f32 %v1890, %v1974
      %v1976 = vpop.f32.mrf.mxu0
      %v1977 = vpop.f32.mrf.mxu0
      %v1978 = vadd.f32 %v1890, %v1977
      %v1979 = vpop.f32.mrf.mxu0
      %1980 = vmatprep.mubr.bf16.mxu0 0
      %1981 = vmatmul.mubr.bf16.gmra.mxu0 %v1860
      %v1982 = vpop.f32.mrf.mxu0
      %v1983 = vadd.f32 %v1890, %v1982
      %v1984 = vpop.f32.mrf.mxu0
      %v1985 = vpop.f32.mrf.mxu0
      %v1986 = vadd.f32 %v1890, %v1985
      %v1987 = vpop.f32.mrf.mxu0
      %1988 = vmatprep.mubr.bf16.mxu0 0
      %1989 = vmatmul.mubr.bf16.gmra.mxu0 %v1861
      %v1990 = vpop.f32.mrf.mxu0
      %v1991 = vadd.f32 %v1890, %v1990
      %v1992 = vpop.f32.mrf.mxu0
      %v1993 = vpop.f32.mrf.mxu0
      %v1994 = vadd.f32 %v1890, %v1993
      %v1995 = vpop.f32.mrf.mxu0
      %1996 = vmatprep.mubr.bf16.mxu0 0
      %1997 = vmatmul.mubr.bf16.gmra.mxu0 %v1862
      %v1998 = vpop.f32.mrf.mxu0
      %v1999 = vadd.f32 %v1890, %v1998
      %v2000 = vpop.f32.mrf.mxu0
      %v2001 = vpop.f32.mrf.mxu0
      %v2002 = vadd.f32 %v1890, %v2001
      %v2003 = vpop.f32.mrf.mxu0
      %2004 = vmatprep.mubr.bf16.mxu0 0
      %2005 = vmatmul.mubr.bf16.gmra.mxu0 %v1863
      %v2006 = vpop.f32.mrf.mxu0
      %v2007 = vadd.f32 %v1890, %v2006
      %v2008 = vpop.f32.mrf.mxu0
      %v2009 = vpop.f32.mrf.mxu0
      %v2010 = vadd.f32 %v1890, %v2009
      %v2011 = vpop.f32.mrf.mxu0
      %2012 = vmatprep.mubr.bf16.mxu0 0
      %2013 = vmatmul.mubr.bf16.gmra.mxu0 %v1864
      %v2014 = vpop.f32.mrf.mxu0
      %v2015 = vadd.f32 %v1890, %v2014
      %v2016 = vpop.f32.mrf.mxu0
      %v2017 = vpop.f32.mrf.mxu0
      %v2018 = vadd.f32 %v1890, %v2017
      %v2019 = vpop.f32.mrf.mxu0
      %2020 = vmatprep.mubr.bf16.mxu0 0
      %2021 = vmatmul.mubr.bf16.gmra.mxu0 %v1865
      %v2022 = vpop.f32.mrf.mxu0
      %v2023 = vadd.f32 %v1890, %v2022
      %v2024 = vpop.f32.mrf.mxu0
      %v2025 = vpop.f32.mrf.mxu0
      %v2026 = vadd.f32 %v1890, %v2025
      %v2027 = vpop.f32.mrf.mxu0
      %2028 = vmatprep.mubr.bf16.mxu0 0
      %2029 = vmatmul.mubr.bf16.gmra.mxu0 %v1866
      %v2030 = vpop.f32.mrf.mxu0
      %v2031 = vadd.f32 %v1890, %v2030
      %v2032 = vpop.f32.mrf.mxu0
      %v2033 = vpop.f32.mrf.mxu0
      %v2034 = vadd.f32 %v1890, %v2033
      %v2035 = vpop.f32.mrf.mxu0
      %2036 = vdwg.mxu0
      %2037 = vst [vmem:[#allocation8] sm:$0xff] %v1975
      %2038 = vst [vmem:[#allocation8 + $0x8] sm:$0xff] %v1978
      %2039 = vst [vmem:[#allocation8 + $0x10] sm:$0xff] %v1983
      %2040 = vst [vmem:[#allocation8 + $0x18] sm:$0xff] %v1986
      %2041 = vst [vmem:[#allocation8 + $0x20] sm:$0xff] %v1991
      %2042 = vst [vmem:[#allocation8 + $0x28] sm:$0xff] %v1994
      %2043 = vst [vmem:[#allocation8 + $0x30] sm:$0xff] %v1999
      %2044 = vst [vmem:[#allocation8 + $0x38] sm:$0xff] %v2002
      %2045 = vst [vmem:[#allocation8 + $0x40] sm:$0xff] %v2007
      %2046 = vst [vmem:[#allocation8 + $0x48] sm:$0xff] %v2010
      %2047 = vst [vmem:[#allocation8 + $0x50] sm:$0xff] %v2015
      %2048 = vst [vmem:[#allocation8 + $0x58] sm:$0xff] %v2018
      %2049 = vst [vmem:[#allocation8 + $0x60] sm:$0xff] %v2023
      %2050 = vst [vmem:[#allocation8 + $0x68] sm:$0xff] %v2026
      %2051 = vst [vmem:[#allocation8 + $0x70] sm:$0xff] %v2031
      %2052 = vst [vmem:[#allocation8 + $0x78] sm:$0xff] %v2034
    $region49: #{tpu_custom_call.1} parent=1 // pred_fallthru
      _
    // Predicated region
    $region50: #{tpu_custom_call.1} parent=1 // pred_check
      _
    $region51: #{tpu_custom_call.1} parent=1 // pred_check_branch
      %2054 = sbr.rel (0) target = $region53
    $region52: #{tpu_custom_call.1} parent=1 // pred_region
      %s2056 = ssub.s32 2048, 2048
      %2057 = vsyncadd [#allocation4], %s2056
      %s2058 = sshll.u32 [#allocation8], 4
      %s2059 = int_to_ptr.vmem [resolvable:$true] %s2058
      %2064 = dma.vmem_to_hbm [thread:$0]  %s2059, 2048, %s7, [#allocation4], 128, 128, 8
    $region53: #{tpu_custom_call.1} parent=1 // pred_fallthru
      _
    // Predicated region
    $region54: #{tpu_custom_call.1} parent=1 // pred_check
      _
    $region55: #{tpu_custom_call.1} parent=1 // pred_check_branch
      %2066 = sbr.rel (0) target = $region57
    $region56: #{tpu_custom_call.1} parent=1 // pred_region
      %2067 = dma.done [#allocation4], 2048
    $region57: #{tpu_custom_call.1} parent=1 // pred_fallthru
      _
    %2068 = vsyncpa [#allocation3], 1
    %2069 = vsyncpa [#allocation6], 1
    %2070 = vsyncpa [#allocation4], 1

</llo_original>
